<compile_context>
chip_gen: v7x
topology: tpu7x:2x2x1
jax: 0.10.0
libtpu: 0.0.40
codegen_flags: <defaults>
</compile_context>

<pallas_src>
import jax
import jax.numpy as jnp
from jax import lax
from jax.experimental import pallas as pl
from jax.experimental.pallas import tpu as pltpu

_MAX_T_CHUNK = 128  # timesteps processed per grid step (per kernel invocation)


def _round_up(x, m):
    return ((x + m - 1) // m) * m


def _gru_chunk_kernel(gx_ref, h0_ref, wrec_ref, bhn_ref, out_ref, h_scratch):
    """One grid step == one batch block x one chunk of timesteps.

    gx_ref:   (tc, b_blk, 3*Dp)  x W_i*^T with folded biases, gates at
                                 128-aligned lane offsets 0 / Dp / 2*Dp.
    h0_ref:   (b_blk, Dp)        initial hidden state for this batch block.
    wrec_ref: (Dp, 3*Dp)         W_hr^T | W_hz^T | W_hn^T (gate-blocked).
    bhn_ref:  (1, Dp)            b_hn (must stay inside r * (...)).
    out_ref:  (tc, b_blk, Dp)    hidden states emitted for this chunk.
    h_scratch:(b_blk, Dp) f32    hidden state carried across chunks.
    """
    c = pl.program_id(1)                    # chunk index (the "arbitrary" axis)

    @pl.when(c == 0)
    def _():
        h_scratch[...] = h0_ref[...].astype(jnp.float32)

    b_blk, dp = h_scratch.shape
    t_chunk = gx_ref.shape[0]

    # Hoist weight / bias loads (and the bias broadcast) out of the time loop.
    wrec = wrec_ref[...]
    bhn = jnp.broadcast_to(bhn_ref[...], (b_blk, dp))

    def step(t, h):
        gx = gx_ref[t]                       # (b_blk, 3*Dp) full-vreg load
        # Single fused recurrent matmul; r/z/n slices are 128-lane aligned.
        gh = jnp.dot(h, wrec, preferred_element_type=jnp.float32)
        r = jax.nn.sigmoid(gx[:, 0 * dp:1 * dp] + gh[:, 0 * dp:1 * dp])
        z = jax.nn.sigmoid(gx[:, 1 * dp:2 * dp] + gh[:, 1 * dp:2 * dp])
        n = jnp.tanh(gx[:, 2 * dp:3 * dp] + r * (gh[:, 2 * dp:3 * dp] + bhn))
        h_new = n + z * (h - n)              # == (1 - z) * n + z * h
        out_ref[t] = h_new.astype(out_ref.dtype)
        return h_new

    # Unroll only while the live (b_blk, Dp) tiles stay within the vreg file.
    vregs_per_tile = max(1, (b_blk * dp) // (8 * 128))
    if t_chunk <= 16:
        unroll = True
    elif vregs_per_tile <= 4:
        unroll = 8
    else:
        unroll = 2

    h_final = lax.fori_loop(0, t_chunk, step, h_scratch[...], unroll=unroll)
    h_scratch[...] = h_final


@jax.jit
def gru_decoder_forward(x_future, encoder_output_layer, encoder_output_net,
                        hx1, hx2, params):
    """Pallas implementation of GRUDecoderModule.forward (ts_skip_size=1, eval).

    x_future: (B, T, D) float32, batch-first as in PyTorch.
    hx1:      (1, B, D) float32.
    encoder_output_layer / encoder_output_net / hx2: unused by this module.
    Returns:  (B, T, D) float32.
    """
    del encoder_output_layer, encoder_output_net, hx2   # unused by GRUDecoderModule
    # TODO(synk): ts_skip_size > 1 path needs fold_tensor/unfold_tensor (not
    # defined in the reference source); only the default ts_skip_size=1 path
    # is implemented.

    B, T, D = x_future.shape
    Dp = _round_up(D, 128)                 # lane-padded hidden size
    Bp = _round_up(B, 8)                   # sublane-padded batch

    # Batch blocking: one block if it fits in 8 sublanes, otherwise two blocks
    # so v7x's two TensorCores each take half the batch ("parallel" grid axis).
    if Bp <= 8:
        b_blk = Bp
    else:
        b_blk = _round_up((Bp + 1) // 2, 8)
        Bp = 2 * b_blk
    num_b_blocks = Bp // b_blk

    wih = params["weight_ih"].astype(jnp.float32)        # (3D, D) rows r|z|n
    whh = params["weight_hh"].astype(jnp.float32)        # (3D, D) rows r|z|n
    bih = params["bias_ih"].astype(jnp.float32)          # (3D,)
    bhh = params["bias_hh"].astype(jnp.float32)          # (3D,)

    # Gate-blocked, lane-padded weights: gate g lives in columns
    # [g*Dp, g*Dp + D).  Padded rows/columns are zero, so padded lanes of h
    # stay exactly zero through the recurrence (no pollution of real lanes).
    wih_pad = jnp.zeros((D, 3 * Dp), jnp.float32)
    wrec_pad = jnp.zeros((Dp, 3 * Dp), jnp.float32)
    bias_pad = jnp.zeros((3 * Dp,), jnp.float32)
    for g in range(3):
        wih_pad = wih_pad.at[:, g * Dp:g * Dp + D].set(wih[g * D:(g + 1) * D, :].T)
        wrec_pad = wrec_pad.at[:D, g * Dp:g * Dp + D].set(whh[g * D:(g + 1) * D, :].T)
        b_g = bih[g * D:(g + 1) * D]
        if g < 2:                            # b_hn must stay inside r * (...)
            b_g = b_g + bhh[g * D:(g + 1) * D]
        bias_pad = bias_pad.at[g * Dp:g * Dp + D].set(b_g)
    bhn_pad = jnp.zeros((1, Dp), jnp.float32).at[0, :D].set(bhh[2 * D:3 * D])

    # Hoisted input projection: ONE MXU matmul over all timesteps plus a
    # single fused bias add; gates already at 128-aligned offsets.
    x_tm = jnp.transpose(x_future, (1, 0, 2))            # (T, B, D) time-major
    gx = jnp.dot(x_tm.reshape(T * B, D), wih_pad,
                 preferred_element_type=jnp.float32)
    gx = gx.reshape(T, B, 3 * Dp) + bias_pad

    # Chunk the time axis; hidden state carried in VMEM scratch per batch block.
    tc = min(T, _MAX_T_CHUNK)
    num_chunks = -(-T // tc)
    t_pad = num_chunks * tc

    # Single pad covering time and batch (lanes are already padded via weights).
    gx = jnp.pad(gx, ((0, t_pad - T), (0, Bp - B), (0, 0)))
    h0 = jnp.pad(hx1[0].astype(jnp.float32), ((0, Bp - B), (0, Dp - D)))

    # Explicit VMEM budget (v5e scoped default is only 16 MiB; v7x physical 64 MiB).
    est = 4 * (2 * tc * b_blk * 3 * Dp       # gx blocks (double-buffered)
               + 2 * tc * b_blk * Dp         # out blocks
               + 2 * Dp * 3 * Dp             # recurrent weights
               + 2 * b_blk * Dp              # h0
               + 2 * 8 * Dp                  # b_hn
               + b_blk * Dp)                 # h scratch
    vmem_limit = int(min(max(est + (4 << 20), 32 << 20), 64 << 20))

    out_tm = pl.pallas_call(
        _gru_chunk_kernel,
        out_shape=jax.ShapeDtypeStruct((t_pad, Bp, Dp), jnp.float32),
        grid_spec=pltpu.PrefetchScalarGridSpec(
            num_scalar_prefetch=0,
            grid=(num_b_blocks, num_chunks),
            in_specs=[
                pl.BlockSpec((tc, b_blk, 3 * Dp), lambda b, c: (c, b, 0)),  # gx
                pl.BlockSpec((b_blk, Dp), lambda b, c: (b, 0)),             # h0
                pl.BlockSpec((Dp, 3 * Dp), lambda b, c: (0, 0)),            # W_rec
                pl.BlockSpec((1, Dp), lambda b, c: (0, 0)),                 # b_hn
            ],
            out_specs=pl.BlockSpec((tc, b_blk, Dp), lambda b, c: (c, b, 0)),
            scratch_shapes=[pltpu.VMEM((b_blk, Dp), jnp.float32)],
        ),
        compiler_params=pltpu.CompilerParams(
            dimension_semantics=("parallel", "arbitrary"),
            vmem_limit_bytes=vmem_limit,
        ),
    )(gx, h0, wrec_pad, bhn_pad)

    # Drop padding; dropout in eval mode is identity.
    # TODO(synk): batch-first in-kernel stores would remove this transpose.
    return jnp.transpose(out_tm[:T, :B, :D], (1, 0, 2))   # back to (B, T, D)


def _reference_gru(x_future, hx1, params):
    """Pure-JAX reference (lax.scan) matching torch nn.GRU semantics."""
    B, T, D = x_future.shape
    wih_t = params["weight_ih"].T
    whh_t = params["weight_hh"].T
    bih = params["bias_ih"]
    bhh = params["bias_hh"]

    def step(h, x_t):
        gx = x_t @ wih_t + bih
        gh = h @ whh_t + bhh
        r = jax.nn.sigmoid(gx[:, :D] + gh[:, :D])
        z = jax.nn.sigmoid(gx[:, D:2 * D] + gh[:, D:2 * D])
        n = jnp.tanh(gx[:, 2 * D:] + r * gh[:, 2 * D:])
        h_new = (1.0 - z) * n + z * h
        return h_new, h_new

    _, ys = jax.lax.scan(step, hx1[0], jnp.transpose(x_future, (1, 0, 2)))
    return jnp.transpose(ys, (1, 0, 2))


def _init_params(key, d_model):
    """Deterministic GRU parameters with PyTorch nn.GRU shapes."""
    k1, k2, k3, k4 = jax.random.split(key, 4)
    bound = 1.0 / jnp.sqrt(d_model)
    return {
        "weight_ih": jax.random.uniform(k1, (3 * d_model, d_model),
                                        jnp.float32, -bound, bound),
        "weight_hh": jax.random.uniform(k2, (3 * d_model, d_model),
                                        jnp.float32, -bound, bound),
        "bias_ih": jax.random.uniform(k3, (3 * d_model,),
                                      jnp.float32, -bound, bound),
        "bias_hh": jax.random.uniform(k4, (3 * d_model,),
                                      jnp.float32, -bound, bound),
    }


if __name__ == "__main__":
    B, T, D = 2, 8, 32   # batch, seq len, d_model

    key = jax.random.PRNGKey(0)
    kx, kh, kp, ke1, ke2, kh2 = jax.random.split(key, 6)

    x_future = jax.random.normal(kx, (B, T, D), jnp.float32)
    hx1 = jax.random.normal(kh, (1, B, D), jnp.float32)
    # Unused by GRUDecoderModule, passed to match the interface:
    encoder_output_layer = jax.random.normal(ke1, (B, T, D), jnp.float32)
    encoder_output_net = jax.random.normal(ke2, (B, T, D), jnp.float32)
    hx2 = jax.random.normal(kh2, (1, B, D), jnp.float32)

    params = _init_params(kp, D)

    out = gru_decoder_forward(x_future, encoder_output_layer,
                              encoder_output_net, hx1, hx2, params)
    out = jax.block_until_ready(out)

    ref = _reference_gru(x_future, hx1, params)
    assert out.shape == (B, T, D)
    assert jnp.allclose(out, ref, atol=1e-4, rtol=1e-4), "mismatch vs reference"

    print("KERNEL_OK")
</pallas_src>

<mosaic_0001>
module attributes {stable_mosaic.version = 11 : i64} {
  func.func @_gru_chunk_kernel(%arg0: i32, %arg1: i32, %arg2: memref<8x8x384xf32, #tpu.memory_space<vmem>>, %arg3: memref<8x128xf32, #tpu.memory_space<vmem>>, %arg4: memref<128x384xf32, #tpu.memory_space<vmem>>, %arg5: memref<1x128xf32, #tpu.memory_space<vmem>>, %arg6: memref<8x8x128xf32, #tpu.memory_space<vmem>>, %arg7: memref<8x128xf32, #tpu.memory_space<vmem>>) attributes {dimension_semantics = [#tpu.dimension_semantics<parallel>, #tpu.dimension_semantics<arbitrary>], iteration_bounds = array<i64: 1, 1>, scalar_prefetch = 0 : i64, scratch_operands = 1 : i64, tpu.core_type = #tpu.core_type<tc>, window_params = [{transform_indices = @transform_0, window_bounds = array<i64: 8, 8, 384>}, {transform_indices = @transform_1, window_bounds = array<i64: 8, 128>}, {pipeline_mode = #tpu.pipeline_mode<synchronous>, transform_indices = @transform_2, window_bounds = array<i64: 128, 384>}, {pipeline_mode = #tpu.pipeline_mode<synchronous>, transform_indices = @transform_3, window_bounds = array<i64: 1, 128>}, {transform_indices = @transform_4, window_bounds = array<i64: 8, 8, 128>}]} {
    %c0_i32 = arith.constant 0 : i32
    %0 = arith.cmpi eq, %arg1, %c0_i32 : i32
    %1 = arith.extui %0 : i1 to i32
    %c0_i32_0 = arith.constant 0 : i32
    %2 = arith.cmpi ne, %1, %c0_i32_0 : i32
    scf.if %2 {
      %c0_64 = arith.constant 0 : index
      %c0_65 = arith.constant 0 : index
      %273 = vector.load %arg3[%c0_64, %c0_65] : memref<8x128xf32, #tpu.memory_space<vmem>>, vector<8x128xf32>
      %c0_66 = arith.constant 0 : index
      %c0_67 = arith.constant 0 : index
      %274 = vector.load %arg7[%c0_66, %c0_67] : memref<8x128xf32, #tpu.memory_space<vmem>>, vector<8x128xf32>
      tpu.vector_store %arg7[%c0_66, %c0_67], %273 {strides = array<i32>} : memref<8x128xf32, #tpu.memory_space<vmem>>, vector<8x128xf32>,
    } else {
    }
    %c0 = arith.constant 0 : index
    %c0_1 = arith.constant 0 : index
    %3 = vector.load %arg4[%c0, %c0_1] : memref<128x384xf32, #tpu.memory_space<vmem>>, vector<128x384xf32>
    %c0_2 = arith.constant 0 : index
    %c0_3 = arith.constant 0 : index
    %4 = vector.load %arg5[%c0_2, %c0_3] : memref<1x128xf32, #tpu.memory_space<vmem>>, vector<1x128xf32>
    %5 = vector.shape_cast %4 : vector<1x128xf32> to vector<1x128xf32>
    %6 = vector.broadcast %5 : vector<1x128xf32> to vector<8x128xf32>
    %c0_4 = arith.constant 0 : index
    %c0_5 = arith.constant 0 : index
    %7 = vector.load %arg7[%c0_4, %c0_5] : memref<8x128xf32, #tpu.memory_space<vmem>>, vector<8x128xf32>
    %c0_i32_6 = arith.constant 0 : i32
    %8 = arith.index_cast %c0_i32_6 : i32 to index
    %c0_7 = arith.constant 0 : index
    %c0_8 = arith.constant 0 : index
    %9 = vector.load %arg2[%8, %c0_7, %c0_8] : memref<8x8x384xf32, #tpu.memory_space<vmem>>, vector<1x8x384xf32>
    %10 = vector.shape_cast %9 : vector<1x8x384xf32> to vector<8x384xf32>
    %cst = arith.constant dense<0.000000e+00> : vector<8x384xf32>
    %11 = tpu.matmul %7, %3, %cst {dimension_numbers = #tpu.dot_dimension_numbers<[1], [0], [0], [1], [0, 0, 1, 1], [], []>} : vector<8x128xf32>, vector<128x384xf32>, vector<8x384xf32> -> vector<8x384xf32>
    %12 = vector.extract_strided_slice %10 {offsets = [0, 0], sizes = [8, 128], strides = [1, 1]} : vector<8x384xf32> to vector<8x128xf32>
    %13 = vector.extract_strided_slice %11 {offsets = [0, 0], sizes = [8, 128], strides = [1, 1]} : vector<8x384xf32> to vector<8x128xf32>
    %14 = arith.addf %12, %13 : vector<8x128xf32>
    %15 = arith.negf %14 : vector<8x128xf32>
    %16 = math.exp %15 : vector<8x128xf32>
    %cst_9 = arith.constant 1.000000e+00 : f32
    %17 = vector.broadcast %cst_9 : f32 to vector<8x128xf32>
    %18 = arith.addf %17, %16 : vector<8x128xf32>
    %19 = arith.divf %17, %18 : vector<8x128xf32>
    %20 = vector.extract_strided_slice %10 {offsets = [0, 128], sizes = [8, 128], strides = [1, 1]} : vector<8x384xf32> to vector<8x128xf32>
    %21 = vector.extract_strided_slice %11 {offsets = [0, 128], sizes = [8, 128], strides = [1, 1]} : vector<8x384xf32> to vector<8x128xf32>
    %22 = arith.addf %20, %21 : vector<8x128xf32>
    %23 = arith.negf %22 : vector<8x128xf32>
    %24 = math.exp %23 : vector<8x128xf32>
    %cst_10 = arith.constant 1.000000e+00 : f32
    %25 = vector.broadcast %cst_10 : f32 to vector<8x128xf32>
    %26 = arith.addf %25, %24 : vector<8x128xf32>
    %27 = arith.divf %25, %26 : vector<8x128xf32>
    %28 = vector.extract_strided_slice %10 {offsets = [0, 256], sizes = [8, 128], strides = [1, 1]} : vector<8x384xf32> to vector<8x128xf32>
    %29 = vector.extract_strided_slice %11 {offsets = [0, 256], sizes = [8, 128], strides = [1, 1]} : vector<8x384xf32> to vector<8x128xf32>
    %30 = arith.addf %29, %6 : vector<8x128xf32>
    %31 = arith.mulf %19, %30 : vector<8x128xf32>
    %32 = arith.addf %28, %31 : vector<8x128xf32>
    %33 = math.tanh %32 : vector<8x128xf32>
    %34 = arith.subf %7, %33 : vector<8x128xf32>
    %35 = arith.mulf %27, %34 : vector<8x128xf32>
    %36 = arith.addf %33, %35 : vector<8x128xf32>
    %37 = arith.index_cast %c0_i32_6 : i32 to index
    %c0_11 = arith.constant 0 : index
    %c0_12 = arith.constant 0 : index
    %38 = vector.load %arg6[%37, %c0_11, %c0_12] : memref<8x8x128xf32, #tpu.memory_space<vmem>>, vector<1x8x128xf32>
    %39 = vector.shape_cast %38 : vector<1x8x128xf32> to vector<8x128xf32>
    %40 = vector.shape_cast %36 : vector<8x128xf32> to vector<1x8x128xf32>
    tpu.vector_store %arg6[%37, %c0_11, %c0_12], %40 {strides = array<i32>} : memref<8x8x128xf32, #tpu.memory_space<vmem>>, vector<1x8x128xf32>,
    %c1_i32 = arith.constant 1 : i32
    %41 = arith.index_cast %c1_i32 : i32 to index
    %c0_13 = arith.constant 0 : index
    %c0_14 = arith.constant 0 : index
    %42 = vector.load %arg2[%41, %c0_13, %c0_14] : memref<8x8x384xf32, #tpu.memory_space<vmem>>, vector<1x8x384xf32>
    %43 = vector.shape_cast %42 : vector<1x8x384xf32> to vector<8x384xf32>
    %cst_15 = arith.constant dense<0.000000e+00> : vector<8x384xf32>
    %44 = tpu.matmul %36, %3, %cst_15 {dimension_numbers = #tpu.dot_dimension_numbers<[1], [0], [0], [1], [0, 0, 1, 1], [], []>} : vector<8x128xf32>, vector<128x384xf32>, vector<8x384xf32> -> vector<8x384xf32>
    %45 = vector.extract_strided_slice %43 {offsets = [0, 0], sizes = [8, 128], strides = [1, 1]} : vector<8x384xf32> to vector<8x128xf32>
    %46 = vector.extract_strided_slice %44 {offsets = [0, 0], sizes = [8, 128], strides = [1, 1]} : vector<8x384xf32> to vector<8x128xf32>
    %47 = arith.addf %45, %46 : vector<8x128xf32>
    %48 = arith.negf %47 : vector<8x128xf32>
    %49 = math.exp %48 : vector<8x128xf32>
    %cst_16 = arith.constant 1.000000e+00 : f32
    %50 = vector.broadcast %cst_16 : f32 to vector<8x128xf32>
    %51 = arith.addf %50, %49 : vector<8x128xf32>
    %52 = arith.divf %50, %51 : vector<8x128xf32>
    %53 = vector.extract_strided_slice %43 {offsets = [0, 128], sizes = [8, 128], strides = [1, 1]} : vector<8x384xf32> to vector<8x128xf32>
    %54 = vector.extract_strided_slice %44 {offsets = [0, 128], sizes = [8, 128], strides = [1, 1]} : vector<8x384xf32> to vector<8x128xf32>
    %55 = arith.addf %53, %54 : vector<8x128xf32>
    %56 = arith.negf %55 : vector<8x128xf32>
    %57 = math.exp %56 : vector<8x128xf32>
    %cst_17 = arith.constant 1.000000e+00 : f32
    %58 = vector.broadcast %cst_17 : f32 to vector<8x128xf32>
    %59 = arith.addf %58, %57 : vector<8x128xf32>
    %60 = arith.divf %58, %59 : vector<8x128xf32>
    %61 = vector.extract_strided_slice %43 {offsets = [0, 256], sizes = [8, 128], strides = [1, 1]} : vector<8x384xf32> to vector<8x128xf32>
    %62 = vector.extract_strided_slice %44 {offsets = [0, 256], sizes = [8, 128], strides = [1, 1]} : vector<8x384xf32> to vector<8x128xf32>
    %63 = arith.addf %62, %6 : vector<8x128xf32>
    %64 = arith.mulf %52, %63 : vector<8x128xf32>
    %65 = arith.addf %61, %64 : vector<8x128xf32>
    %66 = math.tanh %65 : vector<8x128xf32>
    %67 = arith.subf %36, %66 : vector<8x128xf32>
    %68 = arith.mulf %60, %67 : vector<8x128xf32>
    %69 = arith.addf %66, %68 : vector<8x128xf32>
    %70 = arith.index_cast %c1_i32 : i32 to index
    %c0_18 = arith.constant 0 : index
    %c0_19 = arith.constant 0 : index
    %71 = vector.load %arg6[%70, %c0_18, %c0_19] : memref<8x8x128xf32, #tpu.memory_space<vmem>>, vector<1x8x128xf32>
    %72 = vector.shape_cast %71 : vector<1x8x128xf32> to vector<8x128xf32>
    %73 = vector.shape_cast %69 : vector<8x128xf32> to vector<1x8x128xf32>
    tpu.vector_store %arg6[%70, %c0_18, %c0_19], %73 {strides = array<i32>} : memref<8x8x128xf32, #tpu.memory_space<vmem>>, vector<1x8x128xf32>,
    %c2_i32 = arith.constant 2 : i32
    %74 = arith.index_cast %c2_i32 : i32 to index
    %c0_20 = arith.constant 0 : index
    %c0_21 = arith.constant 0 : index
    %75 = vector.load %arg2[%74, %c0_20, %c0_21] : memref<8x8x384xf32, #tpu.memory_space<vmem>>, vector<1x8x384xf32>
    %76 = vector.shape_cast %75 : vector<1x8x384xf32> to vector<8x384xf32>
    %cst_22 = arith.constant dense<0.000000e+00> : vector<8x384xf32>
    %77 = tpu.matmul %69, %3, %cst_22 {dimension_numbers = #tpu.dot_dimension_numbers<[1], [0], [0], [1], [0, 0, 1, 1], [], []>} : vector<8x128xf32>, vector<128x384xf32>, vector<8x384xf32> -> vector<8x384xf32>
    %78 = vector.extract_strided_slice %76 {offsets = [0, 0], sizes = [8, 128], strides = [1, 1]} : vector<8x384xf32> to vector<8x128xf32>
    %79 = vector.extract_strided_slice %77 {offsets = [0, 0], sizes = [8, 128], strides = [1, 1]} : vector<8x384xf32> to vector<8x128xf32>
    %80 = arith.addf %78, %79 : vector<8x128xf32>
    %81 = arith.negf %80 : vector<8x128xf32>
    %82 = math.exp %81 : vector<8x128xf32>
    %cst_23 = arith.constant 1.000000e+00 : f32
    %83 = vector.broadcast %cst_23 : f32 to vector<8x128xf32>
    %84 = arith.addf %83, %82 : vector<8x128xf32>
    %85 = arith.divf %83, %84 : vector<8x128xf32>
    %86 = vector.extract_strided_slice %76 {offsets = [0, 128], sizes = [8, 128], strides = [1, 1]} : vector<8x384xf32> to vector<8x128xf32>
    %87 = vector.extract_strided_slice %77 {offsets = [0, 128], sizes = [8, 128], strides = [1, 1]} : vector<8x384xf32> to vector<8x128xf32>
    %88 = arith.addf %86, %87 : vector<8x128xf32>
    %89 = arith.negf %88 : vector<8x128xf32>
    %90 = math.exp %89 : vector<8x128xf32>
    %cst_24 = arith.constant 1.000000e+00 : f32
    %91 = vector.broadcast %cst_24 : f32 to vector<8x128xf32>
    %92 = arith.addf %91, %90 : vector<8x128xf32>
    %93 = arith.divf %91, %92 : vector<8x128xf32>
    %94 = vector.extract_strided_slice %76 {offsets = [0, 256], sizes = [8, 128], strides = [1, 1]} : vector<8x384xf32> to vector<8x128xf32>
    %95 = vector.extract_strided_slice %77 {offsets = [0, 256], sizes = [8, 128], strides = [1, 1]} : vector<8x384xf32> to vector<8x128xf32>
    %96 = arith.addf %95, %6 : vector<8x128xf32>
    %97 = arith.mulf %85, %96 : vector<8x128xf32>
    %98 = arith.addf %94, %97 : vector<8x128xf32>
    %99 = math.tanh %98 : vector<8x128xf32>
    %100 = arith.subf %69, %99 : vector<8x128xf32>
    %101 = arith.mulf %93, %100 : vector<8x128xf32>
    %102 = arith.addf %99, %101 : vector<8x128xf32>
    %103 = arith.index_cast %c2_i32 : i32 to index
    %c0_25 = arith.constant 0 : index
    %c0_26 = arith.constant 0 : index
    %104 = vector.load %arg6[%103, %c0_25, %c0_26] : memref<8x8x128xf32, #tpu.memory_space<vmem>>, vector<1x8x128xf32>
    %105 = vector.shape_cast %104 : vector<1x8x128xf32> to vector<8x128xf32>
    %106 = vector.shape_cast %102 : vector<8x128xf32> to vector<1x8x128xf32>
    tpu.vector_store %arg6[%103, %c0_25, %c0_26], %106 {strides = array<i32>} : memref<8x8x128xf32, #tpu.memory_space<vmem>>, vector<1x8x128xf32>,
    %c3_i32 = arith.constant 3 : i32
    %107 = arith.index_cast %c3_i32 : i32 to index
    %c0_27 = arith.constant 0 : index
    %c0_28 = arith.constant 0 : index
    %108 = vector.load %arg2[%107, %c0_27, %c0_28] : memref<8x8x384xf32, #tpu.memory_space<vmem>>, vector<1x8x384xf32>
    %109 = vector.shape_cast %108 : vector<1x8x384xf32> to vector<8x384xf32>
    %cst_29 = arith.constant dense<0.000000e+00> : vector<8x384xf32>
    %110 = tpu.matmul %102, %3, %cst_29 {dimension_numbers = #tpu.dot_dimension_numbers<[1], [0], [0], [1], [0, 0, 1, 1], [], []>} : vector<8x128xf32>, vector<128x384xf32>, vector<8x384xf32> -> vector<8x384xf32>
    %111 = vector.extract_strided_slice %109 {offsets = [0, 0], sizes = [8, 128], strides = [1, 1]} : vector<8x384xf32> to vector<8x128xf32>
    %112 = vector.extract_strided_slice %110 {offsets = [0, 0], sizes = [8, 128], strides = [1, 1]} : vector<8x384xf32> to vector<8x128xf32>
    %113 = arith.addf %111, %112 : vector<8x128xf32>
    %114 = arith.negf %113 : vector<8x128xf32>
    %115 = math.exp %114 : vector<8x128xf32>
    %cst_30 = arith.constant 1.000000e+00 : f32
    %116 = vector.broadcast %cst_30 : f32 to vector<8x128xf32>
    %117 = arith.addf %116, %115 : vector<8x128xf32>
    %118 = arith.divf %116, %117 : vector<8x128xf32>
    %119 = vector.extract_strided_slice %109 {offsets = [0, 128], sizes = [8, 128], strides = [1, 1]} : vector<8x384xf32> to vector<8x128xf32>
    %120 = vector.extract_strided_slice %110 {offsets = [0, 128], sizes = [8, 128], strides = [1, 1]} : vector<8x384xf32> to vector<8x128xf32>
    %121 = arith.addf %119, %120 : vector<8x128xf32>
    %122 = arith.negf %121 : vector<8x128xf32>
    %123 = math.exp %122 : vector<8x128xf32>
    %cst_31 = arith.constant 1.000000e+00 : f32
    %124 = vector.broadcast %cst_31 : f32 to vector<8x128xf32>
    %125 = arith.addf %124, %123 : vector<8x128xf32>
    %126 = arith.divf %124, %125 : vector<8x128xf32>
    %127 = vector.extract_strided_slice %109 {offsets = [0, 256], sizes = [8, 128], strides = [1, 1]} : vector<8x384xf32> to vector<8x128xf32>
    %128 = vector.extract_strided_slice %110 {offsets = [0, 256], sizes = [8, 128], strides = [1, 1]} : vector<8x384xf32> to vector<8x128xf32>
    %129 = arith.addf %128, %6 : vector<8x128xf32>
    %130 = arith.mulf %118, %129 : vector<8x128xf32>
    %131 = arith.addf %127, %130 : vector<8x128xf32>
    %132 = math.tanh %131 : vector<8x128xf32>
    %133 = arith.subf %102, %132 : vector<8x128xf32>
    %134 = arith.mulf %126, %133 : vector<8x128xf32>
    %135 = arith.addf %132, %134 : vector<8x128xf32>
    %136 = arith.index_cast %c3_i32 : i32 to index
    %c0_32 = arith.constant 0 : index
    %c0_33 = arith.constant 0 : index
    %137 = vector.load %arg6[%136, %c0_32, %c0_33] : memref<8x8x128xf32, #tpu.memory_space<vmem>>, vector<1x8x128xf32>
    %138 = vector.shape_cast %137 : vector<1x8x128xf32> to vector<8x128xf32>
    %139 = vector.shape_cast %135 : vector<8x128xf32> to vector<1x8x128xf32>
    tpu.vector_store %arg6[%136, %c0_32, %c0_33], %139 {strides = array<i32>} : memref<8x8x128xf32, #tpu.memory_space<vmem>>, vector<1x8x128xf32>,
    %c4_i32 = arith.constant 4 : i32
    %140 = arith.index_cast %c4_i32 : i32 to index
    %c0_34 = arith.constant 0 : index
    %c0_35 = arith.constant 0 : index
    %141 = vector.load %arg2[%140, %c0_34, %c0_35] : memref<8x8x384xf32, #tpu.memory_space<vmem>>, vector<1x8x384xf32>
    %142 = vector.shape_cast %141 : vector<1x8x384xf32> to vector<8x384xf32>
    %cst_36 = arith.constant dense<0.000000e+00> : vector<8x384xf32>
    %143 = tpu.matmul %135, %3, %cst_36 {dimension_numbers = #tpu.dot_dimension_numbers<[1], [0], [0], [1], [0, 0, 1, 1], [], []>} : vector<8x128xf32>, vector<128x384xf32>, vector<8x384xf32> -> vector<8x384xf32>
    %144 = vector.extract_strided_slice %142 {offsets = [0, 0], sizes = [8, 128], strides = [1, 1]} : vector<8x384xf32> to vector<8x128xf32>
    %145 = vector.extract_strided_slice %143 {offsets = [0, 0], sizes = [8, 128], strides = [1, 1]} : vector<8x384xf32> to vector<8x128xf32>
    %146 = arith.addf %144, %145 : vector<8x128xf32>
    %147 = arith.negf %146 : vector<8x128xf32>
    %148 = math.exp %147 : vector<8x128xf32>
    %cst_37 = arith.constant 1.000000e+00 : f32
    %149 = vector.broadcast %cst_37 : f32 to vector<8x128xf32>
    %150 = arith.addf %149, %148 : vector<8x128xf32>
    %151 = arith.divf %149, %150 : vector<8x128xf32>
    %152 = vector.extract_strided_slice %142 {offsets = [0, 128], sizes = [8, 128], strides = [1, 1]} : vector<8x384xf32> to vector<8x128xf32>
    %153 = vector.extract_strided_slice %143 {offsets = [0, 128], sizes = [8, 128], strides = [1, 1]} : vector<8x384xf32> to vector<8x128xf32>
    %154 = arith.addf %152, %153 : vector<8x128xf32>
    %155 = arith.negf %154 : vector<8x128xf32>
    %156 = math.exp %155 : vector<8x128xf32>
    %cst_38 = arith.constant 1.000000e+00 : f32
    %157 = vector.broadcast %cst_38 : f32 to vector<8x128xf32>
    %158 = arith.addf %157, %156 : vector<8x128xf32>
    %159 = arith.divf %157, %158 : vector<8x128xf32>
    %160 = vector.extract_strided_slice %142 {offsets = [0, 256], sizes = [8, 128], strides = [1, 1]} : vector<8x384xf32> to vector<8x128xf32>
    %161 = vector.extract_strided_slice %143 {offsets = [0, 256], sizes = [8, 128], strides = [1, 1]} : vector<8x384xf32> to vector<8x128xf32>
    %162 = arith.addf %161, %6 : vector<8x128xf32>
    %163 = arith.mulf %151, %162 : vector<8x128xf32>
    %164 = arith.addf %160, %163 : vector<8x128xf32>
    %165 = math.tanh %164 : vector<8x128xf32>
    %166 = arith.subf %135, %165 : vector<8x128xf32>
    %167 = arith.mulf %159, %166 : vector<8x128xf32>
    %168 = arith.addf %165, %167 : vector<8x128xf32>
    %169 = arith.index_cast %c4_i32 : i32 to index
    %c0_39 = arith.constant 0 : index
    %c0_40 = arith.constant 0 : index
    %170 = vector.load %arg6[%169, %c0_39, %c0_40] : memref<8x8x128xf32, #tpu.memory_space<vmem>>, vector<1x8x128xf32>
    %171 = vector.shape_cast %170 : vector<1x8x128xf32> to vector<8x128xf32>
    %172 = vector.shape_cast %168 : vector<8x128xf32> to vector<1x8x128xf32>
    tpu.vector_store %arg6[%169, %c0_39, %c0_40], %172 {strides = array<i32>} : memref<8x8x128xf32, #tpu.memory_space<vmem>>, vector<1x8x128xf32>,
    %c5_i32 = arith.constant 5 : i32
    %173 = arith.index_cast %c5_i32 : i32 to index
    %c0_41 = arith.constant 0 : index
    %c0_42 = arith.constant 0 : index
    %174 = vector.load %arg2[%173, %c0_41, %c0_42] : memref<8x8x384xf32, #tpu.memory_space<vmem>>, vector<1x8x384xf32>
    %175 = vector.shape_cast %174 : vector<1x8x384xf32> to vector<8x384xf32>
    %cst_43 = arith.constant dense<0.000000e+00> : vector<8x384xf32>
    %176 = tpu.matmul %168, %3, %cst_43 {dimension_numbers = #tpu.dot_dimension_numbers<[1], [0], [0], [1], [0, 0, 1, 1], [], []>} : vector<8x128xf32>, vector<128x384xf32>, vector<8x384xf32> -> vector<8x384xf32>
    %177 = vector.extract_strided_slice %175 {offsets = [0, 0], sizes = [8, 128], strides = [1, 1]} : vector<8x384xf32> to vector<8x128xf32>
    %178 = vector.extract_strided_slice %176 {offsets = [0, 0], sizes = [8, 128], strides = [1, 1]} : vector<8x384xf32> to vector<8x128xf32>
    %179 = arith.addf %177, %178 : vector<8x128xf32>
    %180 = arith.negf %179 : vector<8x128xf32>
    %181 = math.exp %180 : vector<8x128xf32>
    %cst_44 = arith.constant 1.000000e+00 : f32
    %182 = vector.broadcast %cst_44 : f32 to vector<8x128xf32>
    %183 = arith.addf %182, %181 : vector<8x128xf32>
    %184 = arith.divf %182, %183 : vector<8x128xf32>
    %185 = vector.extract_strided_slice %175 {offsets = [0, 128], sizes = [8, 128], strides = [1, 1]} : vector<8x384xf32> to vector<8x128xf32>
    %186 = vector.extract_strided_slice %176 {offsets = [0, 128], sizes = [8, 128], strides = [1, 1]} : vector<8x384xf32> to vector<8x128xf32>
    %187 = arith.addf %185, %186 : vector<8x128xf32>
    %188 = arith.negf %187 : vector<8x128xf32>
    %189 = math.exp %188 : vector<8x128xf32>
    %cst_45 = arith.constant 1.000000e+00 : f32
    %190 = vector.broadcast %cst_45 : f32 to vector<8x128xf32>
    %191 = arith.addf %190, %189 : vector<8x128xf32>
    %192 = arith.divf %190, %191 : vector<8x128xf32>
    %193 = vector.extract_strided_slice %175 {offsets = [0, 256], sizes = [8, 128], strides = [1, 1]} : vector<8x384xf32> to vector<8x128xf32>
    %194 = vector.extract_strided_slice %176 {offsets = [0, 256], sizes = [8, 128], strides = [1, 1]} : vector<8x384xf32> to vector<8x128xf32>
    %195 = arith.addf %194, %6 : vector<8x128xf32>
    %196 = arith.mulf %184, %195 : vector<8x128xf32>
    %197 = arith.addf %193, %196 : vector<8x128xf32>
    %198 = math.tanh %197 : vector<8x128xf32>
    %199 = arith.subf %168, %198 : vector<8x128xf32>
    %200 = arith.mulf %192, %199 : vector<8x128xf32>
    %201 = arith.addf %198, %200 : vector<8x128xf32>
    %202 = arith.index_cast %c5_i32 : i32 to index
    %c0_46 = arith.constant 0 : index
    %c0_47 = arith.constant 0 : index
    %203 = vector.load %arg6[%202, %c0_46, %c0_47] : memref<8x8x128xf32, #tpu.memory_space<vmem>>, vector<1x8x128xf32>
    %204 = vector.shape_cast %203 : vector<1x8x128xf32> to vector<8x128xf32>
    %205 = vector.shape_cast %201 : vector<8x128xf32> to vector<1x8x128xf32>
    tpu.vector_store %arg6[%202, %c0_46, %c0_47], %205 {strides = array<i32>} : memref<8x8x128xf32, #tpu.memory_space<vmem>>, vector<1x8x128xf32>,
    %c6_i32 = arith.constant 6 : i32
    %206 = arith.index_cast %c6_i32 : i32 to index
    %c0_48 = arith.constant 0 : index
    %c0_49 = arith.constant 0 : index
    %207 = vector.load %arg2[%206, %c0_48, %c0_49] : memref<8x8x384xf32, #tpu.memory_space<vmem>>, vector<1x8x384xf32>
    %208 = vector.shape_cast %207 : vector<1x8x384xf32> to vector<8x384xf32>
    %cst_50 = arith.constant dense<0.000000e+00> : vector<8x384xf32>
    %209 = tpu.matmul %201, %3, %cst_50 {dimension_numbers = #tpu.dot_dimension_numbers<[1], [0], [0], [1], [0, 0, 1, 1], [], []>} : vector<8x128xf32>, vector<128x384xf32>, vector<8x384xf32> -> vector<8x384xf32>
    %210 = vector.extract_strided_slice %208 {offsets = [0, 0], sizes = [8, 128], strides = [1, 1]} : vector<8x384xf32> to vector<8x128xf32>
    %211 = vector.extract_strided_slice %209 {offsets = [0, 0], sizes = [8, 128], strides = [1, 1]} : vector<8x384xf32> to vector<8x128xf32>
    %212 = arith.addf %210, %211 : vector<8x128xf32>
    %213 = arith.negf %212 : vector<8x128xf32>
    %214 = math.exp %213 : vector<8x128xf32>
    %cst_51 = arith.constant 1.000000e+00 : f32
    %215 = vector.broadcast %cst_51 : f32 to vector<8x128xf32>
    %216 = arith.addf %215, %214 : vector<8x128xf32>
    %217 = arith.divf %215, %216 : vector<8x128xf32>
    %218 = vector.extract_strided_slice %208 {offsets = [0, 128], sizes = [8, 128], strides = [1, 1]} : vector<8x384xf32> to vector<8x128xf32>
    %219 = vector.extract_strided_slice %209 {offsets = [0, 128], sizes = [8, 128], strides = [1, 1]} : vector<8x384xf32> to vector<8x128xf32>
    %220 = arith.addf %218, %219 : vector<8x128xf32>
    %221 = arith.negf %220 : vector<8x128xf32>
    %222 = math.exp %221 : vector<8x128xf32>
    %cst_52 = arith.constant 1.000000e+00 : f32
    %223 = vector.broadcast %cst_52 : f32 to vector<8x128xf32>
    %224 = arith.addf %223, %222 : vector<8x128xf32>
    %225 = arith.divf %223, %224 : vector<8x128xf32>
    %226 = vector.extract_strided_slice %208 {offsets = [0, 256], sizes = [8, 128], strides = [1, 1]} : vector<8x384xf32> to vector<8x128xf32>
    %227 = vector.extract_strided_slice %209 {offsets = [0, 256], sizes = [8, 128], strides = [1, 1]} : vector<8x384xf32> to vector<8x128xf32>
    %228 = arith.addf %227, %6 : vector<8x128xf32>
    %229 = arith.mulf %217, %228 : vector<8x128xf32>
    %230 = arith.addf %226, %229 : vector<8x128xf32>
    %231 = math.tanh %230 : vector<8x128xf32>
    %232 = arith.subf %201, %231 : vector<8x128xf32>
    %233 = arith.mulf %225, %232 : vector<8x128xf32>
    %234 = arith.addf %231, %233 : vector<8x128xf32>
    %235 = arith.index_cast %c6_i32 : i32 to index
    %c0_53 = arith.constant 0 : index
    %c0_54 = arith.constant 0 : index
    %236 = vector.load %arg6[%235, %c0_53, %c0_54] : memref<8x8x128xf32, #tpu.memory_space<vmem>>, vector<1x8x128xf32>
    %237 = vector.shape_cast %236 : vector<1x8x128xf32> to vector<8x128xf32>
    %238 = vector.shape_cast %234 : vector<8x128xf32> to vector<1x8x128xf32>
    tpu.vector_store %arg6[%235, %c0_53, %c0_54], %238 {strides = array<i32>} : memref<8x8x128xf32, #tpu.memory_space<vmem>>, vector<1x8x128xf32>,
    %c7_i32 = arith.constant 7 : i32
    %239 = arith.index_cast %c7_i32 : i32 to index
    %c0_55 = arith.constant 0 : index
    %c0_56 = arith.constant 0 : index
    %240 = vector.load %arg2[%239, %c0_55, %c0_56] : memref<8x8x384xf32, #tpu.memory_space<vmem>>, vector<1x8x384xf32>
    %241 = vector.shape_cast %240 : vector<1x8x384xf32> to vector<8x384xf32>
    %cst_57 = arith.constant dense<0.000000e+00> : vector<8x384xf32>
    %242 = tpu.matmul %234, %3, %cst_57 {dimension_numbers = #tpu.dot_dimension_numbers<[1], [0], [0], [1], [0, 0, 1, 1], [], []>} : vector<8x128xf32>, vector<128x384xf32>, vector<8x384xf32> -> vector<8x384xf32>
    %243 = vector.extract_strided_slice %241 {offsets = [0, 0], sizes = [8, 128], strides = [1, 1]} : vector<8x384xf32> to vector<8x128xf32>
    %244 = vector.extract_strided_slice %242 {offsets = [0, 0], sizes = [8, 128], strides = [1, 1]} : vector<8x384xf32> to vector<8x128xf32>
    %245 = arith.addf %243, %244 : vector<8x128xf32>
    %246 = arith.negf %245 : vector<8x128xf32>
    %247 = math.exp %246 : vector<8x128xf32>
    %cst_58 = arith.constant 1.000000e+00 : f32
    %248 = vector.broadcast %cst_58 : f32 to vector<8x128xf32>
    %249 = arith.addf %248, %247 : vector<8x128xf32>
    %250 = arith.divf %248, %249 : vector<8x128xf32>
    %251 = vector.extract_strided_slice %241 {offsets = [0, 128], sizes = [8, 128], strides = [1, 1]} : vector<8x384xf32> to vector<8x128xf32>
    %252 = vector.extract_strided_slice %242 {offsets = [0, 128], sizes = [8, 128], strides = [1, 1]} : vector<8x384xf32> to vector<8x128xf32>
    %253 = arith.addf %251, %252 : vector<8x128xf32>
    %254 = arith.negf %253 : vector<8x128xf32>
    %255 = math.exp %254 : vector<8x128xf32>
    %cst_59 = arith.constant 1.000000e+00 : f32
    %256 = vector.broadcast %cst_59 : f32 to vector<8x128xf32>
    %257 = arith.addf %256, %255 : vector<8x128xf32>
    %258 = arith.divf %256, %257 : vector<8x128xf32>
    %259 = vector.extract_strided_slice %241 {offsets = [0, 256], sizes = [8, 128], strides = [1, 1]} : vector<8x384xf32> to vector<8x128xf32>
    %260 = vector.extract_strided_slice %242 {offsets = [0, 256], sizes = [8, 128], strides = [1, 1]} : vector<8x384xf32> to vector<8x128xf32>
    %261 = arith.addf %260, %6 : vector<8x128xf32>
    %262 = arith.mulf %250, %261 : vector<8x128xf32>
    %263 = arith.addf %259, %262 : vector<8x128xf32>
    %264 = math.tanh %263 : vector<8x128xf32>
    %265 = arith.subf %234, %264 : vector<8x128xf32>
    %266 = arith.mulf %258, %265 : vector<8x128xf32>
    %267 = arith.addf %264, %266 : vector<8x128xf32>
    %268 = arith.index_cast %c7_i32 : i32 to index
    %c0_60 = arith.constant 0 : index
    %c0_61 = arith.constant 0 : index
    %269 = vector.load %arg6[%268, %c0_60, %c0_61] : memref<8x8x128xf32, #tpu.memory_space<vmem>>, vector<1x8x128xf32>
    %270 = vector.shape_cast %269 : vector<1x8x128xf32> to vector<8x128xf32>
    %271 = vector.shape_cast %267 : vector<8x128xf32> to vector<1x8x128xf32>
    tpu.vector_store %arg6[%268, %c0_60, %c0_61], %271 {strides = array<i32>} : memref<8x8x128xf32, #tpu.memory_space<vmem>>, vector<1x8x128xf32>,
    %c8_i32 = arith.constant 8 : i32
    %c0_62 = arith.constant 0 : index
    %c0_63 = arith.constant 0 : index
    %272 = vector.load %arg7[%c0_62, %c0_63] : memref<8x128xf32, #tpu.memory_space<vmem>>, vector<8x128xf32>
    tpu.vector_store %arg7[%c0_62, %c0_63], %267 {strides = array<i32>} : memref<8x128xf32, #tpu.memory_space<vmem>>, vector<8x128xf32>,
    return
  }
  func.func @transform_0(%arg0: i32, %arg1: i32) -> (i32, i32, i32) {
    %c0_i32 = arith.constant 0 : i32
    %c0_i32_0 = arith.constant 0 : i32
    return %arg1, %arg0, %c0_i32 : i32, i32, i32
  }
  func.func @transform_1(%arg0: i32, %arg1: i32) -> (i32, i32) {
    %c0_i32 = arith.constant 0 : i32
    %c0_i32_0 = arith.constant 0 : i32
    return %arg0, %c0_i32 : i32, i32
  }
  func.func @transform_2(%arg0: i32, %arg1: i32) -> (i32, i32) {
    %c0_i32 = arith.constant 0 : i32
    %c0_i32_0 = arith.constant 0 : i32
    %c0_i32_1 = arith.constant 0 : i32
    return %c0_i32, %c0_i32_0 : i32, i32
  }
  func.func @transform_3(%arg0: i32, %arg1: i32) -> (i32, i32) {
    %c0_i32 = arith.constant 0 : i32
    %c0_i32_0 = arith.constant 0 : i32
    %c0_i32_1 = arith.constant 0 : i32
    return %c0_i32, %c0_i32_0 : i32, i32
  }
  func.func @transform_4(%arg0: i32, %arg1: i32) -> (i32, i32, i32) {
    %c0_i32 = arith.constant 0 : i32
    %c0_i32_0 = arith.constant 0 : i32
    return %arg1, %arg0, %c0_i32 : i32, i32, i32
  }
}

</mosaic_0001>

<llo_original>
// kernel: gru_decoder_forward.1
$region0: #{gru_decoder_forward.1}
  #allocation0 [shape = 'u32[]', space=smem, size = 0x4, offset = 0x4, fixed_abs, tag = 'smem constant byte address 0x4 - core index']
  #allocation1 [shape = 'u32[144,128]{1,0:T(1,128)}', space=vmem, size = 0x12000, scoped, tag = 'internal scratch']
  #allocation2 [shape = 'f32[8,128]{1,0:T(8,128)}', space=vmem, size = 0x1000, scoped, tag = 'scratch operand']
  %s0 = inlined_call_operand.vmem [shape: f32[8,8,384], index: 0, kind: input, shape index: {}]
  %s1 = inlined_call_operand.vmem [shape: f32[8,128], index: 1, kind: input, shape index: {}]
  %s2 = inlined_call_operand.vmem [shape: f32[128,384], index: 2, kind: input, shape index: {}]
  %s3 = inlined_call_operand.vmem [shape: f32[1,128], index: 3, kind: input, shape index: {}]
  %s4 = inlined_call_operand.vmem [shape: f32[8,8,128], index: 4, kind: output, shape index: {}]
  %s5 = sld [smem:[#allocation0]]
  $region30: #{gru_decoder_forward.1} parent=0
    _
  %s7 = ssub.s32 1, %s5
  %s8 = scalar_select 0, %s7, %s5
  // Predicated region
  $region2: #{gru_decoder_forward.1} parent=0 // pred_check
    _
  $region3: #{gru_decoder_forward.1} parent=0 // pred_check_branch
    %10 = sbr.rel (0) target = $region5
  $region4: #{gru_decoder_forward.1} parent=0 // pred_region
    _
  $region5: #{gru_decoder_forward.1} parent=0 // pred_fallthru
    _
  // Predicated region
  $region6: #{gru_decoder_forward.1} parent=0 // pred_check
    _
  $region7: #{gru_decoder_forward.1} parent=0 // pred_check_branch
    %12 = sbr.rel (0) target = $region9
  $region8: #{gru_decoder_forward.1} parent=0 // pred_region
    _
  $region9: #{gru_decoder_forward.1} parent=0 // pred_fallthru
    _
  // Predicated region
  $region10: #{gru_decoder_forward.1} parent=0 // pred_check
    _
  $region11: #{gru_decoder_forward.1} parent=0 // pred_check_branch
    %14 = sbr.rel (0) target = $region13
  $region12: #{gru_decoder_forward.1} parent=0 // pred_region
    _
  $region13: #{gru_decoder_forward.1} parent=0 // pred_fallthru
    _
  // Predicated region
  $region14: #{gru_decoder_forward.1} parent=0 // pred_check
    _
  $region15: #{gru_decoder_forward.1} parent=0 // pred_check_branch
    %16 = sbr.rel (0) target = $region17
  $region16: #{gru_decoder_forward.1} parent=0 // pred_region
    _
  $region17: #{gru_decoder_forward.1} parent=0 // pred_fallthru
    _
  %p17 = scmp.eq.s32.totalorder 0, 0
  // Predicated region
  $region18: #{gru_decoder_forward.1} parent=0 // pred_check
    %p18 = pneg %p17
  $region19: #{gru_decoder_forward.1} parent=0 // pred_check_branch
    %20 = sbr.rel (%p18) target = $region21
  $region20: #{gru_decoder_forward.1} parent=0 // pred_region
    %v21 = vld [vmem:[%s1] sm:$0xff]
    %22 = vst [vmem:[#allocation2] sm:$0xff] %v21
  $region21: #{gru_decoder_forward.1} parent=0 // pred_fallthru
    _
  %v23 = vld [vmem:[%s2] sm:$0xff]
  %v24 = vld [vmem:[%s2 + $0x8] sm:$0xff]
  %v25 = vld [vmem:[%s2 + $0x10] sm:$0xff]
  %v26 = vld [vmem:[%s2 + $0x18] sm:$0xff]
  %v27 = vld [vmem:[%s2 + $0x20] sm:$0xff]
  %v28 = vld [vmem:[%s2 + $0x28] sm:$0xff]
  %v29 = vld [vmem:[%s2 + $0x30] sm:$0xff]
  %v30 = vld [vmem:[%s2 + $0x38] sm:$0xff]
  %v31 = vld [vmem:[%s2 + $0x40] sm:$0xff]
  %v32 = vld [vmem:[%s2 + $0x48] sm:$0xff]
  %v33 = vld [vmem:[%s2 + $0x50] sm:$0xff]
  %v34 = vld [vmem:[%s2 + $0x58] sm:$0xff]
  %v35 = vld [vmem:[%s2 + $0x60] sm:$0xff]
  %v36 = vld [vmem:[%s2 + $0x68] sm:$0xff]
  %v37 = vld [vmem:[%s2 + $0x70] sm:$0xff]
  %v38 = vld [vmem:[%s2 + $0x78] sm:$0xff]
  %v39 = vld [vmem:[%s2 + $0x80] sm:$0xff]
  %v40 = vld [vmem:[%s2 + $0x88] sm:$0xff]
  %v41 = vld [vmem:[%s2 + $0x90] sm:$0xff]
  %v42 = vld [vmem:[%s2 + $0x98] sm:$0xff]
  %v43 = vld [vmem:[%s2 + $0xa0] sm:$0xff]
  %v44 = vld [vmem:[%s2 + $0xa8] sm:$0xff]
  %v45 = vld [vmem:[%s2 + $0xb0] sm:$0xff]
  %v46 = vld [vmem:[%s2 + $0xb8] sm:$0xff]
  %v47 = vld [vmem:[%s2 + $0xc0] sm:$0xff]
  %v48 = vld [vmem:[%s2 + $0xc8] sm:$0xff]
  %v49 = vld [vmem:[%s2 + $0xd0] sm:$0xff]
  %v50 = vld [vmem:[%s2 + $0xd8] sm:$0xff]
  %v51 = vld [vmem:[%s2 + $0xe0] sm:$0xff]
  %v52 = vld [vmem:[%s2 + $0xe8] sm:$0xff]
  %v53 = vld [vmem:[%s2 + $0xf0] sm:$0xff]
  %v54 = vld [vmem:[%s2 + $0xf8] sm:$0xff]
  %v55 = vld [vmem:[%s2 + $0x100] sm:$0xff]
  %v56 = vld [vmem:[%s2 + $0x108] sm:$0xff]
  %v57 = vld [vmem:[%s2 + $0x110] sm:$0xff]
  %v58 = vld [vmem:[%s2 + $0x118] sm:$0xff]
  %v59 = vld [vmem:[%s2 + $0x120] sm:$0xff]
  %v60 = vld [vmem:[%s2 + $0x128] sm:$0xff]
  %v61 = vld [vmem:[%s2 + $0x130] sm:$0xff]
  %v62 = vld [vmem:[%s2 + $0x138] sm:$0xff]
  %v63 = vld [vmem:[%s2 + $0x140] sm:$0xff]
  %v64 = vld [vmem:[%s2 + $0x148] sm:$0xff]
  %v65 = vld [vmem:[%s2 + $0x150] sm:$0xff]
  %v66 = vld [vmem:[%s2 + $0x158] sm:$0xff]
  %v67 = vld [vmem:[%s2 + $0x160] sm:$0xff]
  %v68 = vld [vmem:[%s2 + $0x168] sm:$0xff]
  %v69 = vld [vmem:[%s2 + $0x170] sm:$0xff]
  %v70 = vld [vmem:[%s2 + $0x178] sm:$0xff]
  %v71 = vld [vmem:[%s3] sm:$0x1]
  %v73 = vlaneseq
  %v74 = vshrl.u32 %v73, 7
  %v75 = vsub.s32 0, %v74
  %v76 = vrot.slane %v71, %v75
  %v78 = vld [vmem:[#allocation2] sm:$0xff]
  %v79 = vld [vmem:[%s0] sm:$0xff]
  %v80 = vld [vmem:[%s0 + $0x8] sm:$0xff]
  %v81 = vld [vmem:[%s0 + $0x10] sm:$0xff]
  %82 = vmatprep.subr.mxu0 %v24
  %83 = vmatpush1.msra.mxu0 %v23
  %84 = vmatprep.subr.mxu0 %v27
  %85 = vmatpush1.msra.mxu0 %v26
  %86 = vmatprep.subr.mxu0 %v30
  %87 = vmatpush1.msra.mxu0 %v29
  %88 = vmatprep.subr.mxu0 %v33
  %89 = vmatpush1.msra.mxu0 %v32
  %90 = vmatprep.subr.mxu0 %v36
  %91 = vmatpush1.msra.mxu0 %v35
  %92 = vmatprep.subr.mxu0 %v39
  %93 = vmatpush1.msra.mxu0 %v38
  %94 = vmatprep.subr.mxu0 %v42
  %95 = vmatpush1.msra.mxu0 %v41
  %96 = vmatprep.subr.mxu0 %v45
  %97 = vmatpush1.msra.mxu0 %v44
  %98 = vmatprep.subr.mxu0 %v48
  %99 = vmatpush1.msra.mxu0 %v47
  %100 = vmatprep.subr.mxu0 %v51
  %101 = vmatpush1.msra.mxu0 %v50
  %102 = vmatprep.subr.mxu0 %v54
  %103 = vmatpush1.msra.mxu0 %v53
  %104 = vmatprep.subr.mxu0 %v57
  %105 = vmatpush1.msra.mxu0 %v56
  %106 = vmatprep.subr.mxu0 %v60
  %107 = vmatpush1.msra.mxu0 %v59
  %108 = vmatprep.subr.mxu0 %v63
  %109 = vmatpush1.msra.mxu0 %v62
  %110 = vmatprep.subr.mxu0 %v66
  %111 = vmatpush1.msra.mxu0 %v65
  %112 = vmatprep.subr.mxu0 %v69
  %113 = vmatpush1.msra.mxu0 %v68
  %114 = vmatprep.subr.mxu0 0.0
  %115 = vmatpush1.msra.mxu0 0.0
  %116 = vmatprep.subr.mxu0 0.0
  %117 = vmatpush1.msra.mxu0 0.0
  %118 = vmatprep.subr.mxu0 0.0
  %119 = vmatpush1.msra.mxu0 0.0
  %120 = vmatprep.subr.mxu0 0.0
  %121 = vmatpush1.msra.mxu0 0.0
  %122 = vmatprep.subr.mxu0 0.0
  %123 = vmatpush1.msra.mxu0 0.0
  %124 = vmatprep.subr.mxu0 0.0
  %125 = vmatpush1.msra.mxu0 0.0
  %126 = vmatprep.subr.mxu0 0.0
  %127 = vmatpush1.msra.mxu0 0.0
  %128 = vmatprep.subr.mxu0 0.0
  %129 = vmatpush1.msra.mxu0 0.0
  %130 = vmatprep.subr.mxu0 0.0
  %131 = vmatpush1.msra.mxu0 0.0
  %132 = vmatprep.subr.mxu0 0.0
  %133 = vmatpush1.msra.mxu0 0.0
  %134 = vmatprep.subr.mxu0 0.0
  %135 = vmatpush1.msra.mxu0 0.0
  %136 = vmatprep.subr.mxu0 0.0
  %137 = vmatpush1.msra.mxu0 0.0
  %138 = vmatprep.subr.mxu0 0.0
  %139 = vmatpush1.msra.mxu0 0.0
  %140 = vmatprep.subr.mxu0 0.0
  %141 = vmatpush1.msra.mxu0 0.0
  %142 = vmatprep.subr.mxu0 0.0
  %143 = vmatpush1.msra.mxu0 0.0
  %144 = vmatprep.subr.mxu0 0.0
  %145 = vmatpush1.msra.mxu0 0.0
  %146 = vmatprep.mubr.f32.mxu0 0.0
  %147 = vmatmul.mubr.f32.gmra.mrb[0].mxu0 %v78
  %v148 = vpop.f32.mrb[0].mxu0
  %v149 = vadd.f32 0.0, %v148
  %v150 = vpop.f32.mrb[0].mxu0
  %v151 = vadd.f32 0.0, %v150
  %152 = vdwg.mxu0
  %153 = vmatprep.subr.mxu0 0.0
  %154 = vmatpush1.msra.mxu0 %v25
  %155 = vmatprep.subr.mxu0 0.0
  %156 = vmatpush1.msra.mxu0 %v28
  %157 = vmatprep.subr.mxu0 0.0
  %158 = vmatpush1.msra.mxu0 %v31
  %159 = vmatprep.subr.mxu0 0.0
  %160 = vmatpush1.msra.mxu0 %v34
  %161 = vmatprep.subr.mxu0 0.0
  %162 = vmatpush1.msra.mxu0 %v37
  %163 = vmatprep.subr.mxu0 0.0
  %164 = vmatpush1.msra.mxu0 %v40
  %165 = vmatprep.subr.mxu0 0.0
  %166 = vmatpush1.msra.mxu0 %v43
  %167 = vmatprep.subr.mxu0 0.0
  %168 = vmatpush1.msra.mxu0 %v46
  %169 = vmatprep.subr.mxu0 0.0
  %170 = vmatpush1.msra.mxu0 %v49
  %171 = vmatprep.subr.mxu0 0.0
  %172 = vmatpush1.msra.mxu0 %v52
  %173 = vmatprep.subr.mxu0 0.0
  %174 = vmatpush1.msra.mxu0 %v55
  %175 = vmatprep.subr.mxu0 0.0
  %176 = vmatpush1.msra.mxu0 %v58
  %177 = vmatprep.subr.mxu0 0.0
  %178 = vmatpush1.msra.mxu0 %v61
  %179 = vmatprep.subr.mxu0 0.0
  %180 = vmatpush1.msra.mxu0 %v64
  %181 = vmatprep.subr.mxu0 0.0
  %182 = vmatpush1.msra.mxu0 %v67
  %183 = vmatprep.subr.mxu0 0.0
  %184 = vmatpush1.msra.mxu0 %v70
  %185 = vmatprep.subr.mxu0 0.0
  %186 = vmatpush1.msra.mxu0 0.0
  %187 = vmatprep.subr.mxu0 0.0
  %188 = vmatpush1.msra.mxu0 0.0
  %189 = vmatprep.subr.mxu0 0.0
  %190 = vmatpush1.msra.mxu0 0.0
  %191 = vmatprep.subr.mxu0 0.0
  %192 = vmatpush1.msra.mxu0 0.0
  %193 = vmatprep.subr.mxu0 0.0
  %194 = vmatpush1.msra.mxu0 0.0
  %195 = vmatprep.subr.mxu0 0.0
  %196 = vmatpush1.msra.mxu0 0.0
  %197 = vmatprep.subr.mxu0 0.0
  %198 = vmatpush1.msra.mxu0 0.0
  %199 = vmatprep.subr.mxu0 0.0
  %200 = vmatpush1.msra.mxu0 0.0
  %201 = vmatprep.subr.mxu0 0.0
  %202 = vmatpush1.msra.mxu0 0.0
  %203 = vmatprep.subr.mxu0 0.0
  %204 = vmatpush1.msra.mxu0 0.0
  %205 = vmatprep.subr.mxu0 0.0
  %206 = vmatpush1.msra.mxu0 0.0
  %207 = vmatprep.subr.mxu0 0.0
  %208 = vmatpush1.msra.mxu0 0.0
  %209 = vmatprep.subr.mxu0 0.0
  %210 = vmatpush1.msra.mxu0 0.0
  %211 = vmatprep.subr.mxu0 0.0
  %212 = vmatpush1.msra.mxu0 0.0
  %213 = vmatprep.subr.mxu0 0.0
  %214 = vmatpush1.msra.mxu0 0.0
  %215 = vmatprep.subr.mxu0 0.0
  %216 = vmatpush1.msra.mxu0 0.0
  %217 = vmatprep.mubr.f32.mxu0 0.0
  %218 = vmatmul.mubr.f32.gmra.mrb[0].mxu0 %v78
  %v219 = vpop.f32.mrb[0].mxu0
  %v220 = vadd.f32 0.0, %v219
  %v221 = vpop.f32.mrb[0].mxu0
  %222 = vdwg.mxu0
  %v223 = vadd.f32 %v79, %v149
  %v224 = vxor.u32 %v223, 2147483648
  %v225 = vmul.f32 %v224, 1.442695
  %v226 = vpow.pop %v225
  %v227 = vadd.f32 %v226, 1.0
  %v228 = vrcp.pop %v227
  %v229 = vmul.f32 1.0, %v228
  %v230 = vadd.f32 %v80, %v151
  %v231 = vxor.u32 %v230, 2147483648
  %v232 = vmul.f32 %v231, 1.442695
  %v233 = vpow.pop %v232
  %v234 = vadd.f32 %v233, 1.0
  %v235 = vrcp.pop %v234
  %v236 = vmul.f32 1.0, %v235
  %v237 = vadd.f32 %v220, %v76
  %v238 = vmul.f32 %v229, %v237
  %v239 = vadd.f32 %v81, %v238
  %v240 = vtanh.pop %v239
  %v241 = vsub.f32 %v78, %v240
  %v242 = vmul.f32 %v236, %v241
  %v243 = vadd.f32 %v240, %v242
  %244 = vst [vmem:[%s4] sm:$0xff] %v243
  %s245 = scalar_lea.vmem %s0, 24
  %v246 = vld [vmem:[%s245] sm:$0xff]
  %v247 = vld [vmem:[%s245 + $0x8] sm:$0xff]
  %v248 = vld [vmem:[%s245 + $0x10] sm:$0xff]
  %249 = vmatprep.subr.mxu0 %v24
  %250 = vmatpush1.msra.mxu0 %v23
  %251 = vmatprep.subr.mxu0 %v27
  %252 = vmatpush1.msra.mxu0 %v26
  %253 = vmatprep.subr.mxu0 %v30
  %254 = vmatpush1.msra.mxu0 %v29
  %255 = vmatprep.subr.mxu0 %v33
  %256 = vmatpush1.msra.mxu0 %v32
  %257 = vmatprep.subr.mxu0 %v36
  %258 = vmatpush1.msra.mxu0 %v35
  %259 = vmatprep.subr.mxu0 %v39
  %260 = vmatpush1.msra.mxu0 %v38
  %261 = vmatprep.subr.mxu0 %v42
  %262 = vmatpush1.msra.mxu0 %v41
  %263 = vmatprep.subr.mxu0 %v45
  %264 = vmatpush1.msra.mxu0 %v44
  %265 = vmatprep.subr.mxu0 %v48
  %266 = vmatpush1.msra.mxu0 %v47
  %267 = vmatprep.subr.mxu0 %v51
  %268 = vmatpush1.msra.mxu0 %v50
  %269 = vmatprep.subr.mxu0 %v54
  %270 = vmatpush1.msra.mxu0 %v53
  %271 = vmatprep.subr.mxu0 %v57
  %272 = vmatpush1.msra.mxu0 %v56
  %273 = vmatprep.subr.mxu0 %v60
  %274 = vmatpush1.msra.mxu0 %v59
  %275 = vmatprep.subr.mxu0 %v63
  %276 = vmatpush1.msra.mxu0 %v62
  %277 = vmatprep.subr.mxu0 %v66
  %278 = vmatpush1.msra.mxu0 %v65
  %279 = vmatprep.subr.mxu0 %v69
  %280 = vmatpush1.msra.mxu0 %v68
  %281 = vmatprep.subr.mxu0 0.0
  %282 = vmatpush1.msra.mxu0 0.0
  %283 = vmatprep.subr.mxu0 0.0
  %284 = vmatpush1.msra.mxu0 0.0
  %285 = vmatprep.subr.mxu0 0.0
  %286 = vmatpush1.msra.mxu0 0.0
  %287 = vmatprep.subr.mxu0 0.0
  %288 = vmatpush1.msra.mxu0 0.0
  %289 = vmatprep.subr.mxu0 0.0
  %290 = vmatpush1.msra.mxu0 0.0
  %291 = vmatprep.subr.mxu0 0.0
  %292 = vmatpush1.msra.mxu0 0.0
  %293 = vmatprep.subr.mxu0 0.0
  %294 = vmatpush1.msra.mxu0 0.0
  %295 = vmatprep.subr.mxu0 0.0
  %296 = vmatpush1.msra.mxu0 0.0
  %297 = vmatprep.subr.mxu0 0.0
  %298 = vmatpush1.msra.mxu0 0.0
  %299 = vmatprep.subr.mxu0 0.0
  %300 = vmatpush1.msra.mxu0 0.0
  %301 = vmatprep.subr.mxu0 0.0
  %302 = vmatpush1.msra.mxu0 0.0
  %303 = vmatprep.subr.mxu0 0.0
  %304 = vmatpush1.msra.mxu0 0.0
  %305 = vmatprep.subr.mxu0 0.0
  %306 = vmatpush1.msra.mxu0 0.0
  %307 = vmatprep.subr.mxu0 0.0
  %308 = vmatpush1.msra.mxu0 0.0
  %309 = vmatprep.subr.mxu0 0.0
  %310 = vmatpush1.msra.mxu0 0.0
  %311 = vmatprep.subr.mxu0 0.0
  %312 = vmatpush1.msra.mxu0 0.0
  %313 = vmatprep.mubr.f32.mxu0 0.0
  %314 = vmatmul.mubr.f32.gmra.mrb[0].mxu0 %v243
  %v315 = vpop.f32.mrb[0].mxu0
  %v316 = vadd.f32 0.0, %v315
  %v317 = vpop.f32.mrb[0].mxu0
  %v318 = vadd.f32 0.0, %v317
  %319 = vdwg.mxu0
  %320 = vmatprep.subr.mxu0 0.0
  %321 = vmatpush1.msra.mxu0 %v25
  %322 = vmatprep.subr.mxu0 0.0
  %323 = vmatpush1.msra.mxu0 %v28
  %324 = vmatprep.subr.mxu0 0.0
  %325 = vmatpush1.msra.mxu0 %v31
  %326 = vmatprep.subr.mxu0 0.0
  %327 = vmatpush1.msra.mxu0 %v34
  %328 = vmatprep.subr.mxu0 0.0
  %329 = vmatpush1.msra.mxu0 %v37
  %330 = vmatprep.subr.mxu0 0.0
  %331 = vmatpush1.msra.mxu0 %v40
  %332 = vmatprep.subr.mxu0 0.0
  %333 = vmatpush1.msra.mxu0 %v43
  %334 = vmatprep.subr.mxu0 0.0
  %335 = vmatpush1.msra.mxu0 %v46
  %336 = vmatprep.subr.mxu0 0.0
  %337 = vmatpush1.msra.mxu0 %v49
  %338 = vmatprep.subr.mxu0 0.0
  %339 = vmatpush1.msra.mxu0 %v52
  %340 = vmatprep.subr.mxu0 0.0
  %341 = vmatpush1.msra.mxu0 %v55
  %342 = vmatprep.subr.mxu0 0.0
  %343 = vmatpush1.msra.mxu0 %v58
  %344 = vmatprep.subr.mxu0 0.0
  %345 = vmatpush1.msra.mxu0 %v61
  %346 = vmatprep.subr.mxu0 0.0
  %347 = vmatpush1.msra.mxu0 %v64
  %348 = vmatprep.subr.mxu0 0.0
  %349 = vmatpush1.msra.mxu0 %v67
  %350 = vmatprep.subr.mxu0 0.0
  %351 = vmatpush1.msra.mxu0 %v70
  %352 = vmatprep.subr.mxu0 0.0
  %353 = vmatpush1.msra.mxu0 0.0
  %354 = vmatprep.subr.mxu0 0.0
  %355 = vmatpush1.msra.mxu0 0.0
  %356 = vmatprep.subr.mxu0 0.0
  %357 = vmatpush1.msra.mxu0 0.0
  %358 = vmatprep.subr.mxu0 0.0
  %359 = vmatpush1.msra.mxu0 0.0
  %360 = vmatprep.subr.mxu0 0.0
  %361 = vmatpush1.msra.mxu0 0.0
  %362 = vmatprep.subr.mxu0 0.0
  %363 = vmatpush1.msra.mxu0 0.0
  %364 = vmatprep.subr.mxu0 0.0
  %365 = vmatpush1.msra.mxu0 0.0
  %366 = vmatprep.subr.mxu0 0.0
  %367 = vmatpush1.msra.mxu0 0.0
  %368 = vmatprep.subr.mxu0 0.0
  %369 = vmatpush1.msra.mxu0 0.0
  %370 = vmatprep.subr.mxu0 0.0
  %371 = vmatpush1.msra.mxu0 0.0
  %372 = vmatprep.subr.mxu0 0.0
  %373 = vmatpush1.msra.mxu0 0.0
  %374 = vmatprep.subr.mxu0 0.0
  %375 = vmatpush1.msra.mxu0 0.0
  %376 = vmatprep.subr.mxu0 0.0
  %377 = vmatpush1.msra.mxu0 0.0
  %378 = vmatprep.subr.mxu0 0.0
  %379 = vmatpush1.msra.mxu0 0.0
  %380 = vmatprep.subr.mxu0 0.0
  %381 = vmatpush1.msra.mxu0 0.0
  %382 = vmatprep.subr.mxu0 0.0
  %383 = vmatpush1.msra.mxu0 0.0
  %384 = vmatprep.mubr.f32.mxu0 0.0
  %385 = vmatmul.mubr.f32.gmra.mrb[0].mxu0 %v243
  %v386 = vpop.f32.mrb[0].mxu0
  %v387 = vadd.f32 0.0, %v386
  %v388 = vpop.f32.mrb[0].mxu0
  %389 = vdwg.mxu0
  %v390 = vadd.f32 %v246, %v316
  %v391 = vxor.u32 %v390, 2147483648
  %v392 = vmul.f32 %v391, 1.442695
  %v393 = vpow.pop %v392
  %v394 = vadd.f32 %v393, 1.0
  %v395 = vrcp.pop %v394
  %v396 = vmul.f32 1.0, %v395
  %v397 = vadd.f32 %v247, %v318
  %v398 = vxor.u32 %v397, 2147483648
  %v399 = vmul.f32 %v398, 1.442695
  %v400 = vpow.pop %v399
  %v401 = vadd.f32 %v400, 1.0
  %v402 = vrcp.pop %v401
  %v403 = vmul.f32 1.0, %v402
  %v404 = vadd.f32 %v387, %v76
  %v405 = vmul.f32 %v396, %v404
  %v406 = vadd.f32 %v248, %v405
  %v407 = vtanh.pop %v406
  %v408 = vsub.f32 %v243, %v407
  %v409 = vmul.f32 %v403, %v408
  %v410 = vadd.f32 %v407, %v409
  %s411 = scalar_lea.vmem %s4, 8
  %412 = vst [vmem:[%s411] sm:$0xff] %v410
  %s413 = scalar_lea.vmem %s0, 48
  %v414 = vld [vmem:[%s413] sm:$0xff]
  %v415 = vld [vmem:[%s413 + $0x8] sm:$0xff]
  %v416 = vld [vmem:[%s413 + $0x10] sm:$0xff]
  %417 = vmatprep.subr.mxu0 %v24
  %418 = vmatpush1.msra.mxu0 %v23
  %419 = vmatprep.subr.mxu0 %v27
  %420 = vmatpush1.msra.mxu0 %v26
  %421 = vmatprep.subr.mxu0 %v30
  %422 = vmatpush1.msra.mxu0 %v29
  %423 = vmatprep.subr.mxu0 %v33
  %424 = vmatpush1.msra.mxu0 %v32
  %425 = vmatprep.subr.mxu0 %v36
  %426 = vmatpush1.msra.mxu0 %v35
  %427 = vmatprep.subr.mxu0 %v39
  %428 = vmatpush1.msra.mxu0 %v38
  %429 = vmatprep.subr.mxu0 %v42
  %430 = vmatpush1.msra.mxu0 %v41
  %431 = vmatprep.subr.mxu0 %v45
  %432 = vmatpush1.msra.mxu0 %v44
  %433 = vmatprep.subr.mxu0 %v48
  %434 = vmatpush1.msra.mxu0 %v47
  %435 = vmatprep.subr.mxu0 %v51
  %436 = vmatpush1.msra.mxu0 %v50
  %437 = vmatprep.subr.mxu0 %v54
  %438 = vmatpush1.msra.mxu0 %v53
  %439 = vmatprep.subr.mxu0 %v57
  %440 = vmatpush1.msra.mxu0 %v56
  %441 = vmatprep.subr.mxu0 %v60
  %442 = vmatpush1.msra.mxu0 %v59
  %443 = vmatprep.subr.mxu0 %v63
  %444 = vmatpush1.msra.mxu0 %v62
  %445 = vmatprep.subr.mxu0 %v66
  %446 = vmatpush1.msra.mxu0 %v65
  %447 = vmatprep.subr.mxu0 %v69
  %448 = vmatpush1.msra.mxu0 %v68
  %449 = vmatprep.subr.mxu0 0.0
  %450 = vmatpush1.msra.mxu0 0.0
  %451 = vmatprep.subr.mxu0 0.0
  %452 = vmatpush1.msra.mxu0 0.0
  %453 = vmatprep.subr.mxu0 0.0
  %454 = vmatpush1.msra.mxu0 0.0
  %455 = vmatprep.subr.mxu0 0.0
  %456 = vmatpush1.msra.mxu0 0.0
  %457 = vmatprep.subr.mxu0 0.0
  %458 = vmatpush1.msra.mxu0 0.0
  %459 = vmatprep.subr.mxu0 0.0
  %460 = vmatpush1.msra.mxu0 0.0
  %461 = vmatprep.subr.mxu0 0.0
  %462 = vmatpush1.msra.mxu0 0.0
  %463 = vmatprep.subr.mxu0 0.0
  %464 = vmatpush1.msra.mxu0 0.0
  %465 = vmatprep.subr.mxu0 0.0
  %466 = vmatpush1.msra.mxu0 0.0
  %467 = vmatprep.subr.mxu0 0.0
  %468 = vmatpush1.msra.mxu0 0.0
  %469 = vmatprep.subr.mxu0 0.0
  %470 = vmatpush1.msra.mxu0 0.0
  %471 = vmatprep.subr.mxu0 0.0
  %472 = vmatpush1.msra.mxu0 0.0
  %473 = vmatprep.subr.mxu0 0.0
  %474 = vmatpush1.msra.mxu0 0.0
  %475 = vmatprep.subr.mxu0 0.0
  %476 = vmatpush1.msra.mxu0 0.0
  %477 = vmatprep.subr.mxu0 0.0
  %478 = vmatpush1.msra.mxu0 0.0
  %479 = vmatprep.subr.mxu0 0.0
  %480 = vmatpush1.msra.mxu0 0.0
  %481 = vmatprep.mubr.f32.mxu0 0.0
  %482 = vmatmul.mubr.f32.gmra.mrb[0].mxu0 %v410
  %v483 = vpop.f32.mrb[0].mxu0
  %v484 = vadd.f32 0.0, %v483
  %v485 = vpop.f32.mrb[0].mxu0
  %v486 = vadd.f32 0.0, %v485
  %487 = vdwg.mxu0
  %488 = vmatprep.subr.mxu0 0.0
  %489 = vmatpush1.msra.mxu0 %v25
  %490 = vmatprep.subr.mxu0 0.0
  %491 = vmatpush1.msra.mxu0 %v28
  %492 = vmatprep.subr.mxu0 0.0
  %493 = vmatpush1.msra.mxu0 %v31
  %494 = vmatprep.subr.mxu0 0.0
  %495 = vmatpush1.msra.mxu0 %v34
  %496 = vmatprep.subr.mxu0 0.0
  %497 = vmatpush1.msra.mxu0 %v37
  %498 = vmatprep.subr.mxu0 0.0
  %499 = vmatpush1.msra.mxu0 %v40
  %500 = vmatprep.subr.mxu0 0.0
  %501 = vmatpush1.msra.mxu0 %v43
  %502 = vmatprep.subr.mxu0 0.0
  %503 = vmatpush1.msra.mxu0 %v46
  %504 = vmatprep.subr.mxu0 0.0
  %505 = vmatpush1.msra.mxu0 %v49
  %506 = vmatprep.subr.mxu0 0.0
  %507 = vmatpush1.msra.mxu0 %v52
  %508 = vmatprep.subr.mxu0 0.0
  %509 = vmatpush1.msra.mxu0 %v55
  %510 = vmatprep.subr.mxu0 0.0
  %511 = vmatpush1.msra.mxu0 %v58
  %512 = vmatprep.subr.mxu0 0.0
  %513 = vmatpush1.msra.mxu0 %v61
  %514 = vmatprep.subr.mxu0 0.0
  %515 = vmatpush1.msra.mxu0 %v64
  %516 = vmatprep.subr.mxu0 0.0
  %517 = vmatpush1.msra.mxu0 %v67
  %518 = vmatprep.subr.mxu0 0.0
  %519 = vmatpush1.msra.mxu0 %v70
  %520 = vmatprep.subr.mxu0 0.0
  %521 = vmatpush1.msra.mxu0 0.0
  %522 = vmatprep.subr.mxu0 0.0
  %523 = vmatpush1.msra.mxu0 0.0
  %524 = vmatprep.subr.mxu0 0.0
  %525 = vmatpush1.msra.mxu0 0.0
  %526 = vmatprep.subr.mxu0 0.0
  %527 = vmatpush1.msra.mxu0 0.0
  %528 = vmatprep.subr.mxu0 0.0
  %529 = vmatpush1.msra.mxu0 0.0
  %530 = vmatprep.subr.mxu0 0.0
  %531 = vmatpush1.msra.mxu0 0.0
  %532 = vmatprep.subr.mxu0 0.0
  %533 = vmatpush1.msra.mxu0 0.0
  %534 = vmatprep.subr.mxu0 0.0
  %535 = vmatpush1.msra.mxu0 0.0
  %536 = vmatprep.subr.mxu0 0.0
  %537 = vmatpush1.msra.mxu0 0.0
  %538 = vmatprep.subr.mxu0 0.0
  %539 = vmatpush1.msra.mxu0 0.0
  %540 = vmatprep.subr.mxu0 0.0
  %541 = vmatpush1.msra.mxu0 0.0
  %542 = vmatprep.subr.mxu0 0.0
  %543 = vmatpush1.msra.mxu0 0.0
  %544 = vmatprep.subr.mxu0 0.0
  %545 = vmatpush1.msra.mxu0 0.0
  %546 = vmatprep.subr.mxu0 0.0
  %547 = vmatpush1.msra.mxu0 0.0
  %548 = vmatprep.subr.mxu0 0.0
  %549 = vmatpush1.msra.mxu0 0.0
  %550 = vmatprep.subr.mxu0 0.0
  %551 = vmatpush1.msra.mxu0 0.0
  %552 = vmatprep.mubr.f32.mxu0 0.0
  %553 = vmatmul.mubr.f32.gmra.mrb[0].mxu0 %v410
  %v554 = vpop.f32.mrb[0].mxu0
  %v555 = vadd.f32 0.0, %v554
  %v556 = vpop.f32.mrb[0].mxu0
  %557 = vdwg.mxu0
  %v558 = vadd.f32 %v414, %v484
  %v559 = vxor.u32 %v558, 2147483648
  %v560 = vmul.f32 %v559, 1.442695
  %v561 = vpow.pop %v560
  %v562 = vadd.f32 %v561, 1.0
  %v563 = vrcp.pop %v562
  %v564 = vmul.f32 1.0, %v563
  %v565 = vadd.f32 %v415, %v486
  %v566 = vxor.u32 %v565, 2147483648
  %v567 = vmul.f32 %v566, 1.442695
  %v568 = vpow.pop %v567
  %v569 = vadd.f32 %v568, 1.0
  %v570 = vrcp.pop %v569
  %v571 = vmul.f32 1.0, %v570
  %v572 = vadd.f32 %v555, %v76
  %v573 = vmul.f32 %v564, %v572
  %v574 = vadd.f32 %v416, %v573
  %v575 = vtanh.pop %v574
  %v576 = vsub.f32 %v410, %v575
  %v577 = vmul.f32 %v571, %v576
  %v578 = vadd.f32 %v575, %v577
  %s579 = scalar_lea.vmem %s4, 16
  %580 = vst [vmem:[%s579] sm:$0xff] %v578
  %s581 = scalar_lea.vmem %s0, 72
  %v582 = vld [vmem:[%s581] sm:$0xff]
  %v583 = vld [vmem:[%s581 + $0x8] sm:$0xff]
  %v584 = vld [vmem:[%s581 + $0x10] sm:$0xff]
  %585 = vmatprep.subr.mxu0 %v24
  %586 = vmatpush1.msra.mxu0 %v23
  %587 = vmatprep.subr.mxu0 %v27
  %588 = vmatpush1.msra.mxu0 %v26
  %589 = vmatprep.subr.mxu0 %v30
  %590 = vmatpush1.msra.mxu0 %v29
  %591 = vmatprep.subr.mxu0 %v33
  %592 = vmatpush1.msra.mxu0 %v32
  %593 = vmatprep.subr.mxu0 %v36
  %594 = vmatpush1.msra.mxu0 %v35
  %595 = vmatprep.subr.mxu0 %v39
  %596 = vmatpush1.msra.mxu0 %v38
  %597 = vmatprep.subr.mxu0 %v42
  %598 = vmatpush1.msra.mxu0 %v41
  %599 = vmatprep.subr.mxu0 %v45
  %600 = vmatpush1.msra.mxu0 %v44
  %601 = vmatprep.subr.mxu0 %v48
  %602 = vmatpush1.msra.mxu0 %v47
  %603 = vmatprep.subr.mxu0 %v51
  %604 = vmatpush1.msra.mxu0 %v50
  %605 = vmatprep.subr.mxu0 %v54
  %606 = vmatpush1.msra.mxu0 %v53
  %607 = vmatprep.subr.mxu0 %v57
  %608 = vmatpush1.msra.mxu0 %v56
  %609 = vmatprep.subr.mxu0 %v60
  %610 = vmatpush1.msra.mxu0 %v59
  %611 = vmatprep.subr.mxu0 %v63
  %612 = vmatpush1.msra.mxu0 %v62
  %613 = vmatprep.subr.mxu0 %v66
  %614 = vmatpush1.msra.mxu0 %v65
  %615 = vmatprep.subr.mxu0 %v69
  %616 = vmatpush1.msra.mxu0 %v68
  %617 = vmatprep.subr.mxu0 0.0
  %618 = vmatpush1.msra.mxu0 0.0
  %619 = vmatprep.subr.mxu0 0.0
  %620 = vmatpush1.msra.mxu0 0.0
  %621 = vmatprep.subr.mxu0 0.0
  %622 = vmatpush1.msra.mxu0 0.0
  %623 = vmatprep.subr.mxu0 0.0
  %624 = vmatpush1.msra.mxu0 0.0
  %625 = vmatprep.subr.mxu0 0.0
  %626 = vmatpush1.msra.mxu0 0.0
  %627 = vmatprep.subr.mxu0 0.0
  %628 = vmatpush1.msra.mxu0 0.0
  %629 = vmatprep.subr.mxu0 0.0
  %630 = vmatpush1.msra.mxu0 0.0
  %631 = vmatprep.subr.mxu0 0.0
  %632 = vmatpush1.msra.mxu0 0.0
  %633 = vmatprep.subr.mxu0 0.0
  %634 = vmatpush1.msra.mxu0 0.0
  %635 = vmatprep.subr.mxu0 0.0
  %636 = vmatpush1.msra.mxu0 0.0
  %637 = vmatprep.subr.mxu0 0.0
  %638 = vmatpush1.msra.mxu0 0.0
  %639 = vmatprep.subr.mxu0 0.0
  %640 = vmatpush1.msra.mxu0 0.0
  %641 = vmatprep.subr.mxu0 0.0
  %642 = vmatpush1.msra.mxu0 0.0
  %643 = vmatprep.subr.mxu0 0.0
  %644 = vmatpush1.msra.mxu0 0.0
  %645 = vmatprep.subr.mxu0 0.0
  %646 = vmatpush1.msra.mxu0 0.0
  %647 = vmatprep.subr.mxu0 0.0
  %648 = vmatpush1.msra.mxu0 0.0
  %649 = vmatprep.mubr.f32.mxu0 0.0
  %650 = vmatmul.mubr.f32.gmra.mrb[0].mxu0 %v578
  %v651 = vpop.f32.mrb[0].mxu0
  %v652 = vadd.f32 0.0, %v651
  %v653 = vpop.f32.mrb[0].mxu0
  %v654 = vadd.f32 0.0, %v653
  %655 = vdwg.mxu0
  %656 = vmatprep.subr.mxu0 0.0
  %657 = vmatpush1.msra.mxu0 %v25
  %658 = vmatprep.subr.mxu0 0.0
  %659 = vmatpush1.msra.mxu0 %v28
  %660 = vmatprep.subr.mxu0 0.0
  %661 = vmatpush1.msra.mxu0 %v31
  %662 = vmatprep.subr.mxu0 0.0
  %663 = vmatpush1.msra.mxu0 %v34
  %664 = vmatprep.subr.mxu0 0.0
  %665 = vmatpush1.msra.mxu0 %v37
  %666 = vmatprep.subr.mxu0 0.0
  %667 = vmatpush1.msra.mxu0 %v40
  %668 = vmatprep.subr.mxu0 0.0
  %669 = vmatpush1.msra.mxu0 %v43
  %670 = vmatprep.subr.mxu0 0.0
  %671 = vmatpush1.msra.mxu0 %v46
  %672 = vmatprep.subr.mxu0 0.0
  %673 = vmatpush1.msra.mxu0 %v49
  %674 = vmatprep.subr.mxu0 0.0
  %675 = vmatpush1.msra.mxu0 %v52
  %676 = vmatprep.subr.mxu0 0.0
  %677 = vmatpush1.msra.mxu0 %v55
  %678 = vmatprep.subr.mxu0 0.0
  %679 = vmatpush1.msra.mxu0 %v58
  %680 = vmatprep.subr.mxu0 0.0
  %681 = vmatpush1.msra.mxu0 %v61
  %682 = vmatprep.subr.mxu0 0.0
  %683 = vmatpush1.msra.mxu0 %v64
  %684 = vmatprep.subr.mxu0 0.0
  %685 = vmatpush1.msra.mxu0 %v67
  %686 = vmatprep.subr.mxu0 0.0
  %687 = vmatpush1.msra.mxu0 %v70
  %688 = vmatprep.subr.mxu0 0.0
  %689 = vmatpush1.msra.mxu0 0.0
  %690 = vmatprep.subr.mxu0 0.0
  %691 = vmatpush1.msra.mxu0 0.0
  %692 = vmatprep.subr.mxu0 0.0
  %693 = vmatpush1.msra.mxu0 0.0
  %694 = vmatprep.subr.mxu0 0.0
  %695 = vmatpush1.msra.mxu0 0.0
  %696 = vmatprep.subr.mxu0 0.0
  %697 = vmatpush1.msra.mxu0 0.0
  %698 = vmatprep.subr.mxu0 0.0
  %699 = vmatpush1.msra.mxu0 0.0
  %700 = vmatprep.subr.mxu0 0.0
  %701 = vmatpush1.msra.mxu0 0.0
  %702 = vmatprep.subr.mxu0 0.0
  %703 = vmatpush1.msra.mxu0 0.0
  %704 = vmatprep.subr.mxu0 0.0
  %705 = vmatpush1.msra.mxu0 0.0
  %706 = vmatprep.subr.mxu0 0.0
  %707 = vmatpush1.msra.mxu0 0.0
  %708 = vmatprep.subr.mxu0 0.0
  %709 = vmatpush1.msra.mxu0 0.0
  %710 = vmatprep.subr.mxu0 0.0
  %711 = vmatpush1.msra.mxu0 0.0
  %712 = vmatprep.subr.mxu0 0.0
  %713 = vmatpush1.msra.mxu0 0.0
  %714 = vmatprep.subr.mxu0 0.0
  %715 = vmatpush1.msra.mxu0 0.0
  %716 = vmatprep.subr.mxu0 0.0
  %717 = vmatpush1.msra.mxu0 0.0
  %718 = vmatprep.subr.mxu0 0.0
  %719 = vmatpush1.msra.mxu0 0.0
  %720 = vmatprep.mubr.f32.mxu0 0.0
  %721 = vmatmul.mubr.f32.gmra.mrb[0].mxu0 %v578
  %v722 = vpop.f32.mrb[0].mxu0
  %v723 = vadd.f32 0.0, %v722
  %v724 = vpop.f32.mrb[0].mxu0
  %725 = vdwg.mxu0
  %v726 = vadd.f32 %v582, %v652
  %v727 = vxor.u32 %v726, 2147483648
  %v728 = vmul.f32 %v727, 1.442695
  %v729 = vpow.pop %v728
  %v730 = vadd.f32 %v729, 1.0
  %v731 = vrcp.pop %v730
  %v732 = vmul.f32 1.0, %v731
  %v733 = vadd.f32 %v583, %v654
  %v734 = vxor.u32 %v733, 2147483648
  %v735 = vmul.f32 %v734, 1.442695
  %v736 = vpow.pop %v735
  %v737 = vadd.f32 %v736, 1.0
  %v738 = vrcp.pop %v737
  %v739 = vmul.f32 1.0, %v738
  %v740 = vadd.f32 %v723, %v76
  %v741 = vmul.f32 %v732, %v740
  %v742 = vadd.f32 %v584, %v741
  %v743 = vtanh.pop %v742
  %v744 = vsub.f32 %v578, %v743
  %v745 = vmul.f32 %v739, %v744
  %v746 = vadd.f32 %v743, %v745
  %s747 = scalar_lea.vmem %s4, 24
  %748 = vst [vmem:[%s747] sm:$0xff] %v746
  %s749 = scalar_lea.vmem %s0, 96
  %v750 = vld [vmem:[%s749] sm:$0xff]
  %v751 = vld [vmem:[%s749 + $0x8] sm:$0xff]
  %v752 = vld [vmem:[%s749 + $0x10] sm:$0xff]
  %753 = vmatprep.subr.mxu0 %v24
  %754 = vmatpush1.msra.mxu0 %v23
  %755 = vmatprep.subr.mxu0 %v27
  %756 = vmatpush1.msra.mxu0 %v26
  %757 = vmatprep.subr.mxu0 %v30
  %758 = vmatpush1.msra.mxu0 %v29
  %759 = vmatprep.subr.mxu0 %v33
  %760 = vmatpush1.msra.mxu0 %v32
  %761 = vmatprep.subr.mxu0 %v36
  %762 = vmatpush1.msra.mxu0 %v35
  %763 = vmatprep.subr.mxu0 %v39
  %764 = vmatpush1.msra.mxu0 %v38
  %765 = vmatprep.subr.mxu0 %v42
  %766 = vmatpush1.msra.mxu0 %v41
  %767 = vmatprep.subr.mxu0 %v45
  %768 = vmatpush1.msra.mxu0 %v44
  %769 = vmatprep.subr.mxu0 %v48
  %770 = vmatpush1.msra.mxu0 %v47
  %771 = vmatprep.subr.mxu0 %v51
  %772 = vmatpush1.msra.mxu0 %v50
  %773 = vmatprep.subr.mxu0 %v54
  %774 = vmatpush1.msra.mxu0 %v53
  %775 = vmatprep.subr.mxu0 %v57
  %776 = vmatpush1.msra.mxu0 %v56
  %777 = vmatprep.subr.mxu0 %v60
  %778 = vmatpush1.msra.mxu0 %v59
  %779 = vmatprep.subr.mxu0 %v63
  %780 = vmatpush1.msra.mxu0 %v62
  %781 = vmatprep.subr.mxu0 %v66
  %782 = vmatpush1.msra.mxu0 %v65
  %783 = vmatprep.subr.mxu0 %v69
  %784 = vmatpush1.msra.mxu0 %v68
  %785 = vmatprep.subr.mxu0 0.0
  %786 = vmatpush1.msra.mxu0 0.0
  %787 = vmatprep.subr.mxu0 0.0
  %788 = vmatpush1.msra.mxu0 0.0
  %789 = vmatprep.subr.mxu0 0.0
  %790 = vmatpush1.msra.mxu0 0.0
  %791 = vmatprep.subr.mxu0 0.0
  %792 = vmatpush1.msra.mxu0 0.0
  %793 = vmatprep.subr.mxu0 0.0
  %794 = vmatpush1.msra.mxu0 0.0
  %795 = vmatprep.subr.mxu0 0.0
  %796 = vmatpush1.msra.mxu0 0.0
  %797 = vmatprep.subr.mxu0 0.0
  %798 = vmatpush1.msra.mxu0 0.0
  %799 = vmatprep.subr.mxu0 0.0
  %800 = vmatpush1.msra.mxu0 0.0
  %801 = vmatprep.subr.mxu0 0.0
  %802 = vmatpush1.msra.mxu0 0.0
  %803 = vmatprep.subr.mxu0 0.0
  %804 = vmatpush1.msra.mxu0 0.0
  %805 = vmatprep.subr.mxu0 0.0
  %806 = vmatpush1.msra.mxu0 0.0
  %807 = vmatprep.subr.mxu0 0.0
  %808 = vmatpush1.msra.mxu0 0.0
  %809 = vmatprep.subr.mxu0 0.0
  %810 = vmatpush1.msra.mxu0 0.0
  %811 = vmatprep.subr.mxu0 0.0
  %812 = vmatpush1.msra.mxu0 0.0
  %813 = vmatprep.subr.mxu0 0.0
  %814 = vmatpush1.msra.mxu0 0.0
  %815 = vmatprep.subr.mxu0 0.0
  %816 = vmatpush1.msra.mxu0 0.0
  %817 = vmatprep.mubr.f32.mxu0 0.0
  %818 = vmatmul.mubr.f32.gmra.mrb[0].mxu0 %v746
  %v819 = vpop.f32.mrb[0].mxu0
  %v820 = vadd.f32 0.0, %v819
  %v821 = vpop.f32.mrb[0].mxu0
  %v822 = vadd.f32 0.0, %v821
  %823 = vdwg.mxu0
  %824 = vmatprep.subr.mxu0 0.0
  %825 = vmatpush1.msra.mxu0 %v25
  %826 = vmatprep.subr.mxu0 0.0
  %827 = vmatpush1.msra.mxu0 %v28
  %828 = vmatprep.subr.mxu0 0.0
  %829 = vmatpush1.msra.mxu0 %v31
  %830 = vmatprep.subr.mxu0 0.0
  %831 = vmatpush1.msra.mxu0 %v34
  %832 = vmatprep.subr.mxu0 0.0
  %833 = vmatpush1.msra.mxu0 %v37
  %834 = vmatprep.subr.mxu0 0.0
  %835 = vmatpush1.msra.mxu0 %v40
  %836 = vmatprep.subr.mxu0 0.0
  %837 = vmatpush1.msra.mxu0 %v43
  %838 = vmatprep.subr.mxu0 0.0
  %839 = vmatpush1.msra.mxu0 %v46
  %840 = vmatprep.subr.mxu0 0.0
  %841 = vmatpush1.msra.mxu0 %v49
  %842 = vmatprep.subr.mxu0 0.0
  %843 = vmatpush1.msra.mxu0 %v52
  %844 = vmatprep.subr.mxu0 0.0
  %845 = vmatpush1.msra.mxu0 %v55
  %846 = vmatprep.subr.mxu0 0.0
  %847 = vmatpush1.msra.mxu0 %v58
  %848 = vmatprep.subr.mxu0 0.0
  %849 = vmatpush1.msra.mxu0 %v61
  %850 = vmatprep.subr.mxu0 0.0
  %851 = vmatpush1.msra.mxu0 %v64
  %852 = vmatprep.subr.mxu0 0.0
  %853 = vmatpush1.msra.mxu0 %v67
  %854 = vmatprep.subr.mxu0 0.0
  %855 = vmatpush1.msra.mxu0 %v70
  %856 = vmatprep.subr.mxu0 0.0
  %857 = vmatpush1.msra.mxu0 0.0
  %858 = vmatprep.subr.mxu0 0.0
  %859 = vmatpush1.msra.mxu0 0.0
  %860 = vmatprep.subr.mxu0 0.0
  %861 = vmatpush1.msra.mxu0 0.0
  %862 = vmatprep.subr.mxu0 0.0
  %863 = vmatpush1.msra.mxu0 0.0
  %864 = vmatprep.subr.mxu0 0.0
  %865 = vmatpush1.msra.mxu0 0.0
  %866 = vmatprep.subr.mxu0 0.0
  %867 = vmatpush1.msra.mxu0 0.0
  %868 = vmatprep.subr.mxu0 0.0
  %869 = vmatpush1.msra.mxu0 0.0
  %870 = vmatprep.subr.mxu0 0.0
  %871 = vmatpush1.msra.mxu0 0.0
  %872 = vmatprep.subr.mxu0 0.0
  %873 = vmatpush1.msra.mxu0 0.0
  %874 = vmatprep.subr.mxu0 0.0
  %875 = vmatpush1.msra.mxu0 0.0
  %876 = vmatprep.subr.mxu0 0.0
  %877 = vmatpush1.msra.mxu0 0.0
  %878 = vmatprep.subr.mxu0 0.0
  %879 = vmatpush1.msra.mxu0 0.0
  %880 = vmatprep.subr.mxu0 0.0
  %881 = vmatpush1.msra.mxu0 0.0
  %882 = vmatprep.subr.mxu0 0.0
  %883 = vmatpush1.msra.mxu0 0.0
  %884 = vmatprep.subr.mxu0 0.0
  %885 = vmatpush1.msra.mxu0 0.0
  %886 = vmatprep.subr.mxu0 0.0
  %887 = vmatpush1.msra.mxu0 0.0
  %888 = vmatprep.mubr.f32.mxu0 0.0
  %889 = vmatmul.mubr.f32.gmra.mrb[0].mxu0 %v746
  %v890 = vpop.f32.mrb[0].mxu0
  %v891 = vadd.f32 0.0, %v890
  %v892 = vpop.f32.mrb[0].mxu0
  %893 = vdwg.mxu0
  %v894 = vadd.f32 %v750, %v820
  %v895 = vxor.u32 %v894, 2147483648
  %v896 = vmul.f32 %v895, 1.442695
  %v897 = vpow.pop %v896
  %v898 = vadd.f32 %v897, 1.0
  %v899 = vrcp.pop %v898
  %v900 = vmul.f32 1.0, %v899
  %v901 = vadd.f32 %v751, %v822
  %v902 = vxor.u32 %v901, 2147483648
  %v903 = vmul.f32 %v902, 1.442695
  %v904 = vpow.pop %v903
  %v905 = vadd.f32 %v904, 1.0
  %v906 = vrcp.pop %v905
  %v907 = vmul.f32 1.0, %v906
  %v908 = vadd.f32 %v891, %v76
  %v909 = vmul.f32 %v900, %v908
  %v910 = vadd.f32 %v752, %v909
  %v911 = vtanh.pop %v910
  %v912 = vsub.f32 %v746, %v911
  %v913 = vmul.f32 %v907, %v912
  %v914 = vadd.f32 %v911, %v913
  %s915 = scalar_lea.vmem %s4, 32
  %916 = vst [vmem:[%s915] sm:$0xff] %v914
  %s917 = scalar_lea.vmem %s0, 120
  %v918 = vld [vmem:[%s917] sm:$0xff]
  %v919 = vld [vmem:[%s917 + $0x8] sm:$0xff]
  %v920 = vld [vmem:[%s917 + $0x10] sm:$0xff]
  %921 = vmatprep.subr.mxu0 %v24
  %922 = vmatpush1.msra.mxu0 %v23
  %923 = vmatprep.subr.mxu0 %v27
  %924 = vmatpush1.msra.mxu0 %v26
  %925 = vmatprep.subr.mxu0 %v30
  %926 = vmatpush1.msra.mxu0 %v29
  %927 = vmatprep.subr.mxu0 %v33
  %928 = vmatpush1.msra.mxu0 %v32
  %929 = vmatprep.subr.mxu0 %v36
  %930 = vmatpush1.msra.mxu0 %v35
  %931 = vmatprep.subr.mxu0 %v39
  %932 = vmatpush1.msra.mxu0 %v38
  %933 = vmatprep.subr.mxu0 %v42
  %934 = vmatpush1.msra.mxu0 %v41
  %935 = vmatprep.subr.mxu0 %v45
  %936 = vmatpush1.msra.mxu0 %v44
  %937 = vmatprep.subr.mxu0 %v48
  %938 = vmatpush1.msra.mxu0 %v47
  %939 = vmatprep.subr.mxu0 %v51
  %940 = vmatpush1.msra.mxu0 %v50
  %941 = vmatprep.subr.mxu0 %v54
  %942 = vmatpush1.msra.mxu0 %v53
  %943 = vmatprep.subr.mxu0 %v57
  %944 = vmatpush1.msra.mxu0 %v56
  %945 = vmatprep.subr.mxu0 %v60
  %946 = vmatpush1.msra.mxu0 %v59
  %947 = vmatprep.subr.mxu0 %v63
  %948 = vmatpush1.msra.mxu0 %v62
  %949 = vmatprep.subr.mxu0 %v66
  %950 = vmatpush1.msra.mxu0 %v65
  %951 = vmatprep.subr.mxu0 %v69
  %952 = vmatpush1.msra.mxu0 %v68
  %953 = vmatprep.subr.mxu0 0.0
  %954 = vmatpush1.msra.mxu0 0.0
  %955 = vmatprep.subr.mxu0 0.0
  %956 = vmatpush1.msra.mxu0 0.0
  %957 = vmatprep.subr.mxu0 0.0
  %958 = vmatpush1.msra.mxu0 0.0
  %959 = vmatprep.subr.mxu0 0.0
  %960 = vmatpush1.msra.mxu0 0.0
  %961 = vmatprep.subr.mxu0 0.0
  %962 = vmatpush1.msra.mxu0 0.0
  %963 = vmatprep.subr.mxu0 0.0
  %964 = vmatpush1.msra.mxu0 0.0
  %965 = vmatprep.subr.mxu0 0.0
  %966 = vmatpush1.msra.mxu0 0.0
  %967 = vmatprep.subr.mxu0 0.0
  %968 = vmatpush1.msra.mxu0 0.0
  %969 = vmatprep.subr.mxu0 0.0
  %970 = vmatpush1.msra.mxu0 0.0
  %971 = vmatprep.subr.mxu0 0.0
  %972 = vmatpush1.msra.mxu0 0.0
  %973 = vmatprep.subr.mxu0 0.0
  %974 = vmatpush1.msra.mxu0 0.0
  %975 = vmatprep.subr.mxu0 0.0
  %976 = vmatpush1.msra.mxu0 0.0
  %977 = vmatprep.subr.mxu0 0.0
  %978 = vmatpush1.msra.mxu0 0.0
  %979 = vmatprep.subr.mxu0 0.0
  %980 = vmatpush1.msra.mxu0 0.0
  %981 = vmatprep.subr.mxu0 0.0
  %982 = vmatpush1.msra.mxu0 0.0
  %983 = vmatprep.subr.mxu0 0.0
  %984 = vmatpush1.msra.mxu0 0.0
  %985 = vmatprep.mubr.f32.mxu0 0.0
  %986 = vmatmul.mubr.f32.gmra.mrb[0].mxu0 %v914
  %v987 = vpop.f32.mrb[0].mxu0
  %v988 = vadd.f32 0.0, %v987
  %v989 = vpop.f32.mrb[0].mxu0
  %v990 = vadd.f32 0.0, %v989
  %991 = vdwg.mxu0
  %992 = vmatprep.subr.mxu0 0.0
  %993 = vmatpush1.msra.mxu0 %v25
  %994 = vmatprep.subr.mxu0 0.0
  %995 = vmatpush1.msra.mxu0 %v28
  %996 = vmatprep.subr.mxu0 0.0
  %997 = vmatpush1.msra.mxu0 %v31
  %998 = vmatprep.subr.mxu0 0.0
  %999 = vmatpush1.msra.mxu0 %v34
  %1000 = vmatprep.subr.mxu0 0.0
  %1001 = vmatpush1.msra.mxu0 %v37
  %1002 = vmatprep.subr.mxu0 0.0
  %1003 = vmatpush1.msra.mxu0 %v40
  %1004 = vmatprep.subr.mxu0 0.0
  %1005 = vmatpush1.msra.mxu0 %v43
  %1006 = vmatprep.subr.mxu0 0.0
  %1007 = vmatpush1.msra.mxu0 %v46
  %1008 = vmatprep.subr.mxu0 0.0
  %1009 = vmatpush1.msra.mxu0 %v49
  %1010 = vmatprep.subr.mxu0 0.0
  %1011 = vmatpush1.msra.mxu0 %v52
  %1012 = vmatprep.subr.mxu0 0.0
  %1013 = vmatpush1.msra.mxu0 %v55
  %1014 = vmatprep.subr.mxu0 0.0
  %1015 = vmatpush1.msra.mxu0 %v58
  %1016 = vmatprep.subr.mxu0 0.0
  %1017 = vmatpush1.msra.mxu0 %v61
  %1018 = vmatprep.subr.mxu0 0.0
  %1019 = vmatpush1.msra.mxu0 %v64
  %1020 = vmatprep.subr.mxu0 0.0
  %1021 = vmatpush1.msra.mxu0 %v67
  %1022 = vmatprep.subr.mxu0 0.0
  %1023 = vmatpush1.msra.mxu0 %v70
  %1024 = vmatprep.subr.mxu0 0.0
  %1025 = vmatpush1.msra.mxu0 0.0
  %1026 = vmatprep.subr.mxu0 0.0
  %1027 = vmatpush1.msra.mxu0 0.0
  %1028 = vmatprep.subr.mxu0 0.0
  %1029 = vmatpush1.msra.mxu0 0.0
  %1030 = vmatprep.subr.mxu0 0.0
  %1031 = vmatpush1.msra.mxu0 0.0
  %1032 = vmatprep.subr.mxu0 0.0
  %1033 = vmatpush1.msra.mxu0 0.0
  %1034 = vmatprep.subr.mxu0 0.0
  %1035 = vmatpush1.msra.mxu0 0.0
  %1036 = vmatprep.subr.mxu0 0.0
  %1037 = vmatpush1.msra.mxu0 0.0
  %1038 = vmatprep.subr.mxu0 0.0
  %1039 = vmatpush1.msra.mxu0 0.0
  %1040 = vmatprep.subr.mxu0 0.0
  %1041 = vmatpush1.msra.mxu0 0.0
  %1042 = vmatprep.subr.mxu0 0.0
  %1043 = vmatpush1.msra.mxu0 0.0
  %1044 = vmatprep.subr.mxu0 0.0
  %1045 = vmatpush1.msra.mxu0 0.0
  %1046 = vmatprep.subr.mxu0 0.0
  %1047 = vmatpush1.msra.mxu0 0.0
  %1048 = vmatprep.subr.mxu0 0.0
  %1049 = vmatpush1.msra.mxu0 0.0
  %1050 = vmatprep.subr.mxu0 0.0
  %1051 = vmatpush1.msra.mxu0 0.0
  %1052 = vmatprep.subr.mxu0 0.0
  %1053 = vmatpush1.msra.mxu0 0.0
  %1054 = vmatprep.subr.mxu0 0.0
  %1055 = vmatpush1.msra.mxu0 0.0
  %1056 = vmatprep.mubr.f32.mxu0 0.0
  %1057 = vmatmul.mubr.f32.gmra.mrb[0].mxu0 %v914
  %v1058 = vpop.f32.mrb[0].mxu0
  %v1059 = vadd.f32 0.0, %v1058
  %v1060 = vpop.f32.mrb[0].mxu0
  %1061 = vdwg.mxu0
  %v1062 = vadd.f32 %v918, %v988
  %v1063 = vxor.u32 %v1062, 2147483648
  %v1064 = vmul.f32 %v1063, 1.442695
  %v1065 = vpow.pop %v1064
  %v1066 = vadd.f32 %v1065, 1.0
  %v1067 = vrcp.pop %v1066
  %v1068 = vmul.f32 1.0, %v1067
  %v1069 = vadd.f32 %v919, %v990
  %v1070 = vxor.u32 %v1069, 2147483648
  %v1071 = vmul.f32 %v1070, 1.442695
  %v1072 = vpow.pop %v1071
  %v1073 = vadd.f32 %v1072, 1.0
  %v1074 = vrcp.pop %v1073
  %v1075 = vmul.f32 1.0, %v1074
  %v1076 = vadd.f32 %v1059, %v76
  %v1077 = vmul.f32 %v1068, %v1076
  %v1078 = vadd.f32 %v920, %v1077
  %v1079 = vtanh.pop %v1078
  %v1080 = vsub.f32 %v914, %v1079
  %v1081 = vmul.f32 %v1075, %v1080
  %v1082 = vadd.f32 %v1079, %v1081
  %s1083 = scalar_lea.vmem %s4, 40
  %1084 = vst [vmem:[%s1083] sm:$0xff] %v1082
  %s1085 = scalar_lea.vmem %s0, 144
  %v1086 = vld [vmem:[%s1085] sm:$0xff]
  %v1087 = vld [vmem:[%s1085 + $0x8] sm:$0xff]
  %v1088 = vld [vmem:[%s1085 + $0x10] sm:$0xff]
  %1089 = vmatprep.subr.mxu0 %v24
  %1090 = vmatpush1.msra.mxu0 %v23
  %1091 = vmatprep.subr.mxu0 %v27
  %1092 = vmatpush1.msra.mxu0 %v26
  %1093 = vmatprep.subr.mxu0 %v30
  %1094 = vmatpush1.msra.mxu0 %v29
  %1095 = vmatprep.subr.mxu0 %v33
  %1096 = vmatpush1.msra.mxu0 %v32
  %1097 = vmatprep.subr.mxu0 %v36
  %1098 = vmatpush1.msra.mxu0 %v35
  %1099 = vmatprep.subr.mxu0 %v39
  %1100 = vmatpush1.msra.mxu0 %v38
  %1101 = vmatprep.subr.mxu0 %v42
  %1102 = vmatpush1.msra.mxu0 %v41
  %1103 = vmatprep.subr.mxu0 %v45
  %1104 = vmatpush1.msra.mxu0 %v44
  %1105 = vmatprep.subr.mxu0 %v48
  %1106 = vmatpush1.msra.mxu0 %v47
  %1107 = vmatprep.subr.mxu0 %v51
  %1108 = vmatpush1.msra.mxu0 %v50
  %1109 = vmatprep.subr.mxu0 %v54
  %1110 = vmatpush1.msra.mxu0 %v53
  %1111 = vmatprep.subr.mxu0 %v57
  %1112 = vmatpush1.msra.mxu0 %v56
  %1113 = vmatprep.subr.mxu0 %v60
  %1114 = vmatpush1.msra.mxu0 %v59
  %1115 = vmatprep.subr.mxu0 %v63
  %1116 = vmatpush1.msra.mxu0 %v62
  %1117 = vmatprep.subr.mxu0 %v66
  %1118 = vmatpush1.msra.mxu0 %v65
  %1119 = vmatprep.subr.mxu0 %v69
  %1120 = vmatpush1.msra.mxu0 %v68
  %1121 = vmatprep.subr.mxu0 0.0
  %1122 = vmatpush1.msra.mxu0 0.0
  %1123 = vmatprep.subr.mxu0 0.0
  %1124 = vmatpush1.msra.mxu0 0.0
  %1125 = vmatprep.subr.mxu0 0.0
  %1126 = vmatpush1.msra.mxu0 0.0
  %1127 = vmatprep.subr.mxu0 0.0
  %1128 = vmatpush1.msra.mxu0 0.0
  %1129 = vmatprep.subr.mxu0 0.0
  %1130 = vmatpush1.msra.mxu0 0.0
  %1131 = vmatprep.subr.mxu0 0.0
  %1132 = vmatpush1.msra.mxu0 0.0
  %1133 = vmatprep.subr.mxu0 0.0
  %1134 = vmatpush1.msra.mxu0 0.0
  %1135 = vmatprep.subr.mxu0 0.0
  %1136 = vmatpush1.msra.mxu0 0.0
  %1137 = vmatprep.subr.mxu0 0.0
  %1138 = vmatpush1.msra.mxu0 0.0
  %1139 = vmatprep.subr.mxu0 0.0
  %1140 = vmatpush1.msra.mxu0 0.0
  %1141 = vmatprep.subr.mxu0 0.0
  %1142 = vmatpush1.msra.mxu0 0.0
  %1143 = vmatprep.subr.mxu0 0.0
  %1144 = vmatpush1.msra.mxu0 0.0
  %1145 = vmatprep.subr.mxu0 0.0
  %1146 = vmatpush1.msra.mxu0 0.0
  %1147 = vmatprep.subr.mxu0 0.0
  %1148 = vmatpush1.msra.mxu0 0.0
  %1149 = vmatprep.subr.mxu0 0.0
  %1150 = vmatpush1.msra.mxu0 0.0
  %1151 = vmatprep.subr.mxu0 0.0
  %1152 = vmatpush1.msra.mxu0 0.0
  %1153 = vmatprep.mubr.f32.mxu0 0.0
  %1154 = vmatmul.mubr.f32.gmra.mrb[0].mxu0 %v1082
  %v1155 = vpop.f32.mrb[0].mxu0
  %v1156 = vadd.f32 0.0, %v1155
  %v1157 = vpop.f32.mrb[0].mxu0
  %v1158 = vadd.f32 0.0, %v1157
  %1159 = vdwg.mxu0
  %1160 = vmatprep.subr.mxu0 0.0
  %1161 = vmatpush1.msra.mxu0 %v25
  %1162 = vmatprep.subr.mxu0 0.0
  %1163 = vmatpush1.msra.mxu0 %v28
  %1164 = vmatprep.subr.mxu0 0.0
  %1165 = vmatpush1.msra.mxu0 %v31
  %1166 = vmatprep.subr.mxu0 0.0
  %1167 = vmatpush1.msra.mxu0 %v34
  %1168 = vmatprep.subr.mxu0 0.0
  %1169 = vmatpush1.msra.mxu0 %v37
  %1170 = vmatprep.subr.mxu0 0.0
  %1171 = vmatpush1.msra.mxu0 %v40
  %1172 = vmatprep.subr.mxu0 0.0
  %1173 = vmatpush1.msra.mxu0 %v43
  %1174 = vmatprep.subr.mxu0 0.0
  %1175 = vmatpush1.msra.mxu0 %v46
  %1176 = vmatprep.subr.mxu0 0.0
  %1177 = vmatpush1.msra.mxu0 %v49
  %1178 = vmatprep.subr.mxu0 0.0
  %1179 = vmatpush1.msra.mxu0 %v52
  %1180 = vmatprep.subr.mxu0 0.0
  %1181 = vmatpush1.msra.mxu0 %v55
  %1182 = vmatprep.subr.mxu0 0.0
  %1183 = vmatpush1.msra.mxu0 %v58
  %1184 = vmatprep.subr.mxu0 0.0
  %1185 = vmatpush1.msra.mxu0 %v61
  %1186 = vmatprep.subr.mxu0 0.0
  %1187 = vmatpush1.msra.mxu0 %v64
  %1188 = vmatprep.subr.mxu0 0.0
  %1189 = vmatpush1.msra.mxu0 %v67
  %1190 = vmatprep.subr.mxu0 0.0
  %1191 = vmatpush1.msra.mxu0 %v70
  %1192 = vmatprep.subr.mxu0 0.0
  %1193 = vmatpush1.msra.mxu0 0.0
  %1194 = vmatprep.subr.mxu0 0.0
  %1195 = vmatpush1.msra.mxu0 0.0
  %1196 = vmatprep.subr.mxu0 0.0
  %1197 = vmatpush1.msra.mxu0 0.0
  %1198 = vmatprep.subr.mxu0 0.0
  %1199 = vmatpush1.msra.mxu0 0.0
  %1200 = vmatprep.subr.mxu0 0.0
  %1201 = vmatpush1.msra.mxu0 0.0
  %1202 = vmatprep.subr.mxu0 0.0
  %1203 = vmatpush1.msra.mxu0 0.0
  %1204 = vmatprep.subr.mxu0 0.0
  %1205 = vmatpush1.msra.mxu0 0.0
  %1206 = vmatprep.subr.mxu0 0.0
  %1207 = vmatpush1.msra.mxu0 0.0
  %1208 = vmatprep.subr.mxu0 0.0
  %1209 = vmatpush1.msra.mxu0 0.0
  %1210 = vmatprep.subr.mxu0 0.0
  %1211 = vmatpush1.msra.mxu0 0.0
  %1212 = vmatprep.subr.mxu0 0.0
  %1213 = vmatpush1.msra.mxu0 0.0
  %1214 = vmatprep.subr.mxu0 0.0
  %1215 = vmatpush1.msra.mxu0 0.0
  %1216 = vmatprep.subr.mxu0 0.0
  %1217 = vmatpush1.msra.mxu0 0.0
  %1218 = vmatprep.subr.mxu0 0.0
  %1219 = vmatpush1.msra.mxu0 0.0
  %1220 = vmatprep.subr.mxu0 0.0
  %1221 = vmatpush1.msra.mxu0 0.0
  %1222 = vmatprep.subr.mxu0 0.0
  %1223 = vmatpush1.msra.mxu0 0.0
  %1224 = vmatprep.mubr.f32.mxu0 0.0
  %1225 = vmatmul.mubr.f32.gmra.mrb[0].mxu0 %v1082
  %v1226 = vpop.f32.mrb[0].mxu0
  %v1227 = vadd.f32 0.0, %v1226
  %v1228 = vpop.f32.mrb[0].mxu0
  %1229 = vdwg.mxu0
  %v1230 = vadd.f32 %v1086, %v1156
  %v1231 = vxor.u32 %v1230, 2147483648
  %v1232 = vmul.f32 %v1231, 1.442695
  %v1233 = vpow.pop %v1232
  %v1234 = vadd.f32 %v1233, 1.0
  %v1235 = vrcp.pop %v1234
  %v1236 = vmul.f32 1.0, %v1235
  %v1237 = vadd.f32 %v1087, %v1158
  %v1238 = vxor.u32 %v1237, 2147483648
  %v1239 = vmul.f32 %v1238, 1.442695
  %v1240 = vpow.pop %v1239
  %v1241 = vadd.f32 %v1240, 1.0
  %v1242 = vrcp.pop %v1241
  %v1243 = vmul.f32 1.0, %v1242
  %v1244 = vadd.f32 %v1227, %v76
  %v1245 = vmul.f32 %v1236, %v1244
  %v1246 = vadd.f32 %v1088, %v1245
  %v1247 = vtanh.pop %v1246
  %v1248 = vsub.f32 %v1082, %v1247
  %v1249 = vmul.f32 %v1243, %v1248
  %v1250 = vadd.f32 %v1247, %v1249
  %s1251 = scalar_lea.vmem %s4, 48
  %1252 = vst [vmem:[%s1251] sm:$0xff] %v1250
  %s1253 = scalar_lea.vmem %s0, 168
  %v1254 = vld [vmem:[%s1253] sm:$0xff]
  %v1255 = vld [vmem:[%s1253 + $0x8] sm:$0xff]
  %v1256 = vld [vmem:[%s1253 + $0x10] sm:$0xff]
  %1257 = vmatprep.subr.mxu0 %v24
  %1258 = vmatpush1.msra.mxu0 %v23
  %1259 = vmatprep.subr.mxu0 %v27
  %1260 = vmatpush1.msra.mxu0 %v26
  %1261 = vmatprep.subr.mxu0 %v30
  %1262 = vmatpush1.msra.mxu0 %v29
  %1263 = vmatprep.subr.mxu0 %v33
  %1264 = vmatpush1.msra.mxu0 %v32
  %1265 = vmatprep.subr.mxu0 %v36
  %1266 = vmatpush1.msra.mxu0 %v35
  %1267 = vmatprep.subr.mxu0 %v39
  %1268 = vmatpush1.msra.mxu0 %v38
  %1269 = vmatprep.subr.mxu0 %v42
  %1270 = vmatpush1.msra.mxu0 %v41
  %1271 = vmatprep.subr.mxu0 %v45
  %1272 = vmatpush1.msra.mxu0 %v44
  %1273 = vmatprep.subr.mxu0 %v48
  %1274 = vmatpush1.msra.mxu0 %v47
  %1275 = vmatprep.subr.mxu0 %v51
  %1276 = vmatpush1.msra.mxu0 %v50
  %1277 = vmatprep.subr.mxu0 %v54
  %1278 = vmatpush1.msra.mxu0 %v53
  %1279 = vmatprep.subr.mxu0 %v57
  %1280 = vmatpush1.msra.mxu0 %v56
  %1281 = vmatprep.subr.mxu0 %v60
  %1282 = vmatpush1.msra.mxu0 %v59
  %1283 = vmatprep.subr.mxu0 %v63
  %1284 = vmatpush1.msra.mxu0 %v62
  %1285 = vmatprep.subr.mxu0 %v66
  %1286 = vmatpush1.msra.mxu0 %v65
  %1287 = vmatprep.subr.mxu0 %v69
  %1288 = vmatpush1.msra.mxu0 %v68
  %1289 = vmatprep.subr.mxu0 0.0
  %1290 = vmatpush1.msra.mxu0 0.0
  %1291 = vmatprep.subr.mxu0 0.0
  %1292 = vmatpush1.msra.mxu0 0.0
  %1293 = vmatprep.subr.mxu0 0.0
  %1294 = vmatpush1.msra.mxu0 0.0
  %1295 = vmatprep.subr.mxu0 0.0
  %1296 = vmatpush1.msra.mxu0 0.0
  %1297 = vmatprep.subr.mxu0 0.0
  %1298 = vmatpush1.msra.mxu0 0.0
  %1299 = vmatprep.subr.mxu0 0.0
  %1300 = vmatpush1.msra.mxu0 0.0
  %1301 = vmatprep.subr.mxu0 0.0
  %1302 = vmatpush1.msra.mxu0 0.0
  %1303 = vmatprep.subr.mxu0 0.0
  %1304 = vmatpush1.msra.mxu0 0.0
  %1305 = vmatprep.subr.mxu0 0.0
  %1306 = vmatpush1.msra.mxu0 0.0
  %1307 = vmatprep.subr.mxu0 0.0
  %1308 = vmatpush1.msra.mxu0 0.0
  %1309 = vmatprep.subr.mxu0 0.0
  %1310 = vmatpush1.msra.mxu0 0.0
  %1311 = vmatprep.subr.mxu0 0.0
  %1312 = vmatpush1.msra.mxu0 0.0
  %1313 = vmatprep.subr.mxu0 0.0
  %1314 = vmatpush1.msra.mxu0 0.0
  %1315 = vmatprep.subr.mxu0 0.0
  %1316 = vmatpush1.msra.mxu0 0.0
  %1317 = vmatprep.subr.mxu0 0.0
  %1318 = vmatpush1.msra.mxu0 0.0
  %1319 = vmatprep.subr.mxu0 0.0
  %1320 = vmatpush1.msra.mxu0 0.0
  %1321 = vmatprep.mubr.f32.mxu0 0.0
  %1322 = vmatmul.mubr.f32.gmra.mrb[0].mxu0 %v1250
  %v1323 = vpop.f32.mrb[0].mxu0
  %v1324 = vadd.f32 0.0, %v1323
  %v1325 = vpop.f32.mrb[0].mxu0
  %v1326 = vadd.f32 0.0, %v1325
  %1327 = vdwg.mxu0
  %1328 = vmatprep.subr.mxu0 0.0
  %1329 = vmatpush1.msra.mxu0 %v25
  %1330 = vmatprep.subr.mxu0 0.0
  %1331 = vmatpush1.msra.mxu0 %v28
  %1332 = vmatprep.subr.mxu0 0.0
  %1333 = vmatpush1.msra.mxu0 %v31
  %1334 = vmatprep.subr.mxu0 0.0
  %1335 = vmatpush1.msra.mxu0 %v34
  %1336 = vmatprep.subr.mxu0 0.0
  %1337 = vmatpush1.msra.mxu0 %v37
  %1338 = vmatprep.subr.mxu0 0.0
  %1339 = vmatpush1.msra.mxu0 %v40
  %1340 = vmatprep.subr.mxu0 0.0
  %1341 = vmatpush1.msra.mxu0 %v43
  %1342 = vmatprep.subr.mxu0 0.0
  %1343 = vmatpush1.msra.mxu0 %v46
  %1344 = vmatprep.subr.mxu0 0.0
  %1345 = vmatpush1.msra.mxu0 %v49
  %1346 = vmatprep.subr.mxu0 0.0
  %1347 = vmatpush1.msra.mxu0 %v52
  %1348 = vmatprep.subr.mxu0 0.0
  %1349 = vmatpush1.msra.mxu0 %v55
  %1350 = vmatprep.subr.mxu0 0.0
  %1351 = vmatpush1.msra.mxu0 %v58
  %1352 = vmatprep.subr.mxu0 0.0
  %1353 = vmatpush1.msra.mxu0 %v61
  %1354 = vmatprep.subr.mxu0 0.0
  %1355 = vmatpush1.msra.mxu0 %v64
  %1356 = vmatprep.subr.mxu0 0.0
  %1357 = vmatpush1.msra.mxu0 %v67
  %1358 = vmatprep.subr.mxu0 0.0
  %1359 = vmatpush1.msra.mxu0 %v70
  %1360 = vmatprep.subr.mxu0 0.0
  %1361 = vmatpush1.msra.mxu0 0.0
  %1362 = vmatprep.subr.mxu0 0.0
  %1363 = vmatpush1.msra.mxu0 0.0
  %1364 = vmatprep.subr.mxu0 0.0
  %1365 = vmatpush1.msra.mxu0 0.0
  %1366 = vmatprep.subr.mxu0 0.0
  %1367 = vmatpush1.msra.mxu0 0.0
  %1368 = vmatprep.subr.mxu0 0.0
  %1369 = vmatpush1.msra.mxu0 0.0
  %1370 = vmatprep.subr.mxu0 0.0
  %1371 = vmatpush1.msra.mxu0 0.0
  %1372 = vmatprep.subr.mxu0 0.0
  %1373 = vmatpush1.msra.mxu0 0.0
  %1374 = vmatprep.subr.mxu0 0.0
  %1375 = vmatpush1.msra.mxu0 0.0
  %1376 = vmatprep.subr.mxu0 0.0
  %1377 = vmatpush1.msra.mxu0 0.0
  %1378 = vmatprep.subr.mxu0 0.0
  %1379 = vmatpush1.msra.mxu0 0.0
  %1380 = vmatprep.subr.mxu0 0.0
  %1381 = vmatpush1.msra.mxu0 0.0
  %1382 = vmatprep.subr.mxu0 0.0
  %1383 = vmatpush1.msra.mxu0 0.0
  %1384 = vmatprep.subr.mxu0 0.0
  %1385 = vmatpush1.msra.mxu0 0.0
  %1386 = vmatprep.subr.mxu0 0.0
  %1387 = vmatpush1.msra.mxu0 0.0
  %1388 = vmatprep.subr.mxu0 0.0
  %1389 = vmatpush1.msra.mxu0 0.0
  %1390 = vmatprep.subr.mxu0 0.0
  %1391 = vmatpush1.msra.mxu0 0.0
  %1392 = vmatprep.mubr.f32.mxu0 0.0
  %1393 = vmatmul.mubr.f32.gmra.mrb[0].mxu0 %v1250
  %v1394 = vpop.f32.mrb[0].mxu0
  %v1395 = vadd.f32 0.0, %v1394
  %v1396 = vpop.f32.mrb[0].mxu0
  %1397 = vdwg.mxu0
  %v1398 = vadd.f32 %v1254, %v1324
  %v1399 = vxor.u32 %v1398, 2147483648
  %v1400 = vmul.f32 %v1399, 1.442695
  %v1401 = vpow.pop %v1400
  %v1402 = vadd.f32 %v1401, 1.0
  %v1403 = vrcp.pop %v1402
  %v1404 = vmul.f32 1.0, %v1403
  %v1405 = vadd.f32 %v1255, %v1326
  %v1406 = vxor.u32 %v1405, 2147483648
  %v1407 = vmul.f32 %v1406, 1.442695
  %v1408 = vpow.pop %v1407
  %v1409 = vadd.f32 %v1408, 1.0
  %v1410 = vrcp.pop %v1409
  %v1411 = vmul.f32 1.0, %v1410
  %v1412 = vadd.f32 %v1395, %v76
  %v1413 = vmul.f32 %v1404, %v1412
  %v1414 = vadd.f32 %v1256, %v1413
  %v1415 = vtanh.pop %v1414
  %v1416 = vsub.f32 %v1250, %v1415
  %v1417 = vmul.f32 %v1411, %v1416
  %v1418 = vadd.f32 %v1415, %v1417
  %s1419 = scalar_lea.vmem %s4, 56
  %1420 = vst [vmem:[%s1419] sm:$0xff] %v1418
  %1421 = vst [vmem:[#allocation2] sm:$0xff] %v1418
  // Predicated region
  $region22: #{gru_decoder_forward.1} parent=0 // pred_check
    _
  $region23: #{gru_decoder_forward.1} parent=0 // pred_check_branch
    %1423 = sbr.rel (0) target = $region25
  $region24: #{gru_decoder_forward.1} parent=0 // pred_region
    _
  $region25: #{gru_decoder_forward.1} parent=0 // pred_fallthru
    _
  // Predicated region
  $region26: #{gru_decoder_forward.1} parent=0 // pred_check
    _
  $region27: #{gru_decoder_forward.1} parent=0 // pred_check_branch
    %1425 = sbr.rel (0) target = $region29
  $region28: #{gru_decoder_forward.1} parent=0 // pred_region
    _
  $region29: #{gru_decoder_forward.1} parent=0 // pred_fallthru
    _

</llo_original>
